<compile_context>
chip_gen: v5e
topology: v5e:2x2
jax: 0.10.0
libtpu: 0.0.40
codegen_flags: <defaults>
</compile_context>

<pallas_src>
import functools

import jax
import jax.numpy as jnp
from jax import lax
from jax.experimental import pallas as pl
from jax.experimental.pallas import tpu as pltpu


def _round_up(x, m):
    return ((x + m - 1) // m) * m


# -----------------------------------------------------------------------------
# Fused kernel.  refs layout:
#   inputs : x, conv_w[0..nl-1], packed_vec, proj_w, fusion_w, fusion_b, w1, b1, w2, b2
#   outputs: o ([B, proj_dim], written only on the last sensor)
#   scratch: pad_buf[0..nl-1], fusion accumulator [B, 128]
# -----------------------------------------------------------------------------
def _fused_model_kernel(x_ref, *refs, nsensors, batch, K, hid,
                        dils, lins, louts, cins, pads_amt, margins):
    nl = len(dils)
    conv_w = refs[0:nl]
    vec_ref = refs[nl]                       # [3*nl+1, hid]: conv_b / bn_scale / bn_shift / proj_b
    projw_ref = refs[nl + 1]                 # [lout_last, hid, hid] bf16
    wf_ref, bf_ref, w1_ref, b1_ref, w2_ref, b2_ref = refs[nl + 2: nl + 8]
    o_ref = refs[nl + 8]
    pad_bufs = refs[nl + 9: nl + 9 + nl]
    acc_ref = refs[2 * nl + 9]               # [B, 128] fusion-layer accumulator

    s = pl.program_id(0)

    # One-time init: zero only the pad margins (scratch persists across the sensor
    # loop and nothing else ever writes them) and the fusion accumulator.
    @pl.when(s == 0)
    def _():
        for i in range(nl):
            m, lin, p, cin = margins[i], lins[i], pads_amt[i], cins[i]
            pad_bufs[i][:, :m, :] = jnp.zeros((batch, m, cin), pad_bufs[i].dtype)
            pad_bufs[i][:, m + lin:, :] = jnp.zeros((batch, p, cin), pad_bufs[i].dtype)
        acc_ref[...] = jnp.zeros_like(acc_ref)

    # Stage this sensor's channels-last input at the 8-aligned data offset.
    m0 = margins[0]
    pad_bufs[0][:, m0:m0 + lins[0], :] = x_ref[...]

    emb = None
    for i in range(nl):
        d, lout, cin = dils[i], louts[i], cins[i]
        m, p = margins[i], pads_amt[i]
        base = m - p                                        # start of conceptual padded array

        # Dilated Conv1d as K accumulated batched dots (no im2col buffer).
        acc = jnp.zeros((batch, lout, hid), jnp.float32)
        for k in range(K):
            xk = pad_bufs[i][:, base + k * d: base + k * d + lout, :]      # [B, lout, cin]
            wk = jnp.broadcast_to(conv_w[i][k * cin:(k + 1) * cin, :],
                                  (batch, cin, hid))                       # bf16 [B, cin, hid]
            acc = acc + lax.dot_general(
                xk.astype(jnp.bfloat16), wk,
                dimension_numbers=(((2,), (1,)), ((0,), (0,))),
                preferred_element_type=jnp.float32)                        # [B, lout, hid]

        # Conv bias -> ReLU -> BatchNorm1d(eval affine); applied once on the 3-D result.
        bias = vec_ref[3 * i: 3 * i + 1, :].reshape(1, 1, hid)
        scale = vec_ref[3 * i + 1: 3 * i + 2, :].reshape(1, 1, hid)
        shift = vec_ref[3 * i + 2: 3 * i + 3, :].reshape(1, 1, hid)
        z = jnp.maximum(acc + bias, 0.0) * scale + shift
        # TODO(synk): nn.Dropout after BN is identity in eval mode; omitted.

        if i + 1 < nl:
            mn = margins[i + 1]
            pad_bufs[i + 1][:, mn:mn + lout, :] = z          # single aligned 3-D store
        else:
            # Projection Linear accumulated per time step (kills the flatten scatter).
            emb = jnp.broadcast_to(vec_ref[3 * nl: 3 * nl + 1, :], (batch, hid))
            zb = z.astype(jnp.bfloat16)
            for l in range(lout):
                emb = emb + jnp.dot(zb[:, l, :], projw_ref[l],
                                    preferred_element_type=jnp.float32)

    # Fusion Linear contribution of this sensor (torch.cat folded into a sum of dots).
    acc_ref[...] += jnp.dot(emb.astype(jnp.bfloat16), wf_ref[...],
                            preferred_element_type=jnp.float32)

    # MLP head only on the last sensor; intermediates never leave vregs/VMEM.
    @pl.when(s == nsensors - 1)
    def _():
        h = jnp.maximum(acc_ref[...] + bf_ref[...], 0.0)
        # TODO(synk): fusion nn.Dropout is identity in eval mode; omitted.
        h = jnp.maximum(
            jnp.dot(h.astype(jnp.bfloat16), w1_ref[...],
                    preferred_element_type=jnp.float32) + b1_ref[...], 0.0)
        out = jnp.dot(h.astype(jnp.bfloat16), w2_ref[...],
                      preferred_element_type=jnp.float32) + b2_ref[...]
        o_ref[...] = out.astype(o_ref.dtype)


def multimodal_forward(x, params, geom, nsensors):
    # x: [B, num_sensors, seq_len, feat_dim]
    B = x.shape[0]
    K, hid = geom["K"], geom["hid"]
    nl = len(geom["dils"])
    lins, louts, cins = geom["lins"], geom["louts"], geom["cins"]
    pads_amt, margins = geom["pads_amt"], geom["margins"]
    proj_dim = params["proj2_w"].shape[1]
    nrows = 3 * nl + 1

    inputs = [x]
    in_specs = [pl.BlockSpec((B, None, lins[0], cins[0]), lambda s: (0, s, 0, 0))]
    for i in range(nl):
        inputs.append(params["conv_w"][i])
        in_specs.append(pl.BlockSpec((None, K * cins[i], hid), lambda s: (s, 0, 0)))
    inputs.append(params["vec"])
    in_specs.append(pl.BlockSpec((None, nrows, hid), lambda s: (s, 0, 0)))
    inputs.append(params["proj_w"])
    in_specs.append(pl.BlockSpec((None, louts[-1], hid, hid), lambda s: (s, 0, 0, 0)))
    inputs.append(params["fusion_w"])
    in_specs.append(pl.BlockSpec((None, hid, 128), lambda s: (s, 0, 0)))
    for arr in (params["fusion_b"], params["proj1_w"], params["proj1_b"],
                params["proj2_w"], params["proj2_b"]):
        inputs.append(arr)
        in_specs.append(pl.BlockSpec(arr.shape, lambda s: (0, 0)))

    scratch = []
    for i in range(nl):
        rows = margins[i] + lins[i] + pads_amt[i]
        scratch.append(pltpu.VMEM((B, rows, cins[i]), jnp.float32))
    scratch.append(pltpu.VMEM((B, 128), jnp.float32))        # fusion accumulator

    kern = functools.partial(
        _fused_model_kernel, nsensors=nsensors, batch=B, K=K, hid=hid,
        dils=geom["dils"], lins=lins, louts=louts, cins=cins,
        pads_amt=pads_amt, margins=margins)

    return pl.pallas_call(
        kern,
        out_shape=jax.ShapeDtypeStruct((B, proj_dim), jnp.float32),
        grid=(nsensors,),
        in_specs=in_specs,
        out_specs=pl.BlockSpec((B, proj_dim), lambda s: (0, 0)),
        scratch_shapes=scratch,
        compiler_params=pltpu.CompilerParams(
            dimension_semantics=("arbitrary",)),   # sensor axis is a reduction now
    )(*inputs)


# -----------------------------------------------------------------------------
# Geometry + deterministic synthetic parameters (stacked per sensor at init time)
# -----------------------------------------------------------------------------
def compute_geometry(feat_dim, hidden_dim, tcn_layers, seq_len, kernel_size=3):
    dils, lins, louts, cins, pads_amt, margins = [], [], [], [], [], []
    L, cin = seq_len, feat_dim
    for i in range(tcn_layers):
        d = 2 ** i
        pad = (kernel_size - 1) * d
        dils.append(d); lins.append(L); cins.append(cin); pads_amt.append(pad)
        margins.append(_round_up(pad, 8))         # 8-aligned left margin for stores
        L = L + 2 * pad - d * (kernel_size - 1)   # = L + pad  (no Chomp1d, as in spec)
        louts.append(L)
        cin = hidden_dim
    return dict(K=kernel_size, hid=hidden_dim, dils=tuple(dils), lins=tuple(lins),
                louts=tuple(louts), cins=tuple(cins), pads_amt=tuple(pads_amt),
                margins=tuple(margins), flat_dim=hidden_dim * L)


def init_params(key, num_sensors, feat_dim, hidden_dim, tcn_layers, seq_len,
                proj_dim, kernel_size=3):
    geom = compute_geometry(feat_dim, hidden_dim, tcn_layers, seq_len, kernel_size)
    keys = iter(jax.random.split(key, 64))

    def nrm(shape, scale=0.05, dtype=jnp.float32):
        return (scale * jax.random.normal(next(keys), shape)).astype(dtype)

    S, K, H, nl = num_sensors, kernel_size, hidden_dim, tcn_layers

    # Conv1d weights flattened tap-major: row k*cin + c, col j  <->  torch W[j, c, k].
    conv_w = [nrm((S, K * geom["cins"][i], H), dtype=jnp.bfloat16) for i in range(nl)]

    # Packed per-sensor vectors: rows [3i]=conv bias, [3i+1]=gamma/sqrt(var+eps),
    # [3i+2]=beta - mean*scale, [3*nl]=projection bias.
    vec_rows = []
    for _ in range(nl):
        vec_rows.append(nrm((S, 1, H)))            # conv bias
        vec_rows.append(1.0 + nrm((S, 1, H)))      # BN scale
        vec_rows.append(nrm((S, 1, H)))            # BN shift
    vec_rows.append(nrm((S, 1, H)))                # projection bias
    vec = jnp.concatenate(vec_rows, axis=1)        # [S, 3*nl+1, H]

    params = dict(
        conv_w=conv_w,
        vec=vec,
        # proj_w[s, l, c, j] == torch W_proj[j, c*Lout + l]: per-timestep weight slices.
        proj_w=nrm((S, geom["louts"][-1], H, H), dtype=jnp.bfloat16),
        # fusion_w[s] == W_fusion[:, s*H:(s+1)*H].T
        fusion_w=nrm((S, H, 128), dtype=jnp.bfloat16),
        fusion_b=nrm((1, 128)),
        proj1_w=nrm((128, 128), dtype=jnp.bfloat16),
        proj1_b=nrm((1, 128)),
        proj2_w=nrm((128, proj_dim), dtype=jnp.bfloat16),
        proj2_b=nrm((1, proj_dim)),
    )
    return params, geom


if __name__ == "__main__":
    B, SEQ, FEAT = 2, 8, 4                  # max_feature_dim = 4
    HIDDEN, TCN_LAYERS, PROJ = 32, 2, 16
    NUM_SENSORS = 2                         # e.g. ["acc", "gyro"]

    key = jax.random.PRNGKey(0)
    k_in, k_p = jax.random.split(key)
    inputs = jax.random.normal(k_in, (B, NUM_SENSORS, SEQ, FEAT), jnp.float32)
    params, geom = init_params(k_p, NUM_SENSORS, FEAT, HIDDEN, TCN_LAYERS, SEQ, PROJ)

    fwd = jax.jit(lambda x, p: multimodal_forward(x, p, geom, NUM_SENSORS))
    out = jax.block_until_ready(fwd(inputs, params))
    assert out.shape == (B, PROJ), out.shape
    assert bool(jnp.all(jnp.isfinite(out)))
    print("KERNEL_OK")
</pallas_src>

<mosaic_0001>
module attributes {stable_mosaic.version = 11 : i64} {
  func.func @_fused_model_kernel(%arg0: i32, %arg1: memref<2x1x8x4xf32, #tpu.memory_space<vmem>>, %arg2: memref<1x12x32xbf16, #tpu.memory_space<vmem>>, %arg3: memref<1x96x32xbf16, #tpu.memory_space<vmem>>, %arg4: memref<1x7x32xf32, #tpu.memory_space<vmem>>, %arg5: memref<1x14x32x32xbf16, #tpu.memory_space<vmem>>, %arg6: memref<1x32x128xbf16, #tpu.memory_space<vmem>>, %arg7: memref<1x128xf32, #tpu.memory_space<vmem>>, %arg8: memref<128x128xbf16, #tpu.memory_space<vmem>>, %arg9: memref<1x128xf32, #tpu.memory_space<vmem>>, %arg10: memref<128x16xbf16, #tpu.memory_space<vmem>>, %arg11: memref<1x16xf32, #tpu.memory_space<vmem>>, %arg12: memref<2x16xf32, #tpu.memory_space<vmem>>, %arg13: memref<2x18x4xf32, #tpu.memory_space<vmem>>, %arg14: memref<2x22x32xf32, #tpu.memory_space<vmem>>, %arg15: memref<2x128xf32, #tpu.memory_space<vmem>>) attributes {dimension_semantics = [#tpu.dimension_semantics<arbitrary>], iteration_bounds = array<i64: 2>, scalar_prefetch = 0 : i64, scratch_operands = 3 : i64, tpu.core_type = #tpu.core_type<tc>, window_params = [{transform_indices = @transform_0, window_bounds = array<i64: 2, 1, 8, 4>}, {transform_indices = @transform_1, window_bounds = array<i64: 1, 12, 32>}, {transform_indices = @transform_2, window_bounds = array<i64: 1, 96, 32>}, {transform_indices = @transform_3, window_bounds = array<i64: 1, 7, 32>}, {transform_indices = @transform_4, window_bounds = array<i64: 1, 14, 32, 32>}, {transform_indices = @transform_5, window_bounds = array<i64: 1, 32, 128>}, {pipeline_mode = #tpu.pipeline_mode<synchronous>, transform_indices = @transform_6, window_bounds = array<i64: 1, 128>}, {pipeline_mode = #tpu.pipeline_mode<synchronous>, transform_indices = @transform_7, window_bounds = array<i64: 128, 128>}, {pipeline_mode = #tpu.pipeline_mode<synchronous>, transform_indices = @transform_8, window_bounds = array<i64: 1, 128>}, {pipeline_mode = #tpu.pipeline_mode<synchronous>, transform_indices = @transform_9, window_bounds = array<i64: 128, 16>}, {pipeline_mode = #tpu.pipeline_mode<synchronous>, transform_indices = @transform_10, window_bounds = array<i64: 1, 16>}, {pipeline_mode = #tpu.pipeline_mode<synchronous>, transform_indices = @transform_11, window_bounds = array<i64: 2, 16>}]} {
    %c0_i32 = arith.constant 0 : i32
    %0 = arith.cmpi eq, %arg0, %c0_i32 : i32
    %1 = arith.extui %0 : i1 to i32
    %c0_i32_0 = arith.constant 0 : i32
    %2 = arith.cmpi ne, %1, %c0_i32_0 : i32
    scf.if %2 {
      %cst_140 = arith.constant 0.000000e+00 : f32
      %190 = vector.broadcast %cst_140 : f32 to vector<2x8x4xf32>
      %c0_141 = arith.constant 0 : index
      %c0_142 = arith.constant 0 : index
      %c0_143 = arith.constant 0 : index
      %191 = vector.load %arg13[%c0_141, %c0_142, %c0_143] : memref<2x18x4xf32, #tpu.memory_space<vmem>>, vector<2x8x4xf32>
      tpu.vector_store %arg13[%c0_141, %c0_142, %c0_143], %190 {strides = array<i32>} : memref<2x18x4xf32, #tpu.memory_space<vmem>>, vector<2x8x4xf32>,
      %cst_144 = arith.constant 0.000000e+00 : f32
      %192 = vector.broadcast %cst_144 : f32 to vector<2x2x4xf32>
      %c0_145 = arith.constant 0 : index
      %c16 = arith.constant 16 : index
      %c0_146 = arith.constant 0 : index
      %193 = vector.load %arg13[%c0_145, %c16, %c0_146] : memref<2x18x4xf32, #tpu.memory_space<vmem>>, vector<2x2x4xf32>
      tpu.vector_store %arg13[%c0_145, %c16, %c0_146], %192 {strides = array<i32>} : memref<2x18x4xf32, #tpu.memory_space<vmem>>, vector<2x2x4xf32>,
      %cst_147 = arith.constant 0.000000e+00 : f32
      %194 = vector.broadcast %cst_147 : f32 to vector<2x8x32xf32>
      %c0_148 = arith.constant 0 : index
      %c0_149 = arith.constant 0 : index
      %c0_150 = arith.constant 0 : index
      %195 = vector.load %arg14[%c0_148, %c0_149, %c0_150] : memref<2x22x32xf32, #tpu.memory_space<vmem>>, vector<2x8x32xf32>
      tpu.vector_store %arg14[%c0_148, %c0_149, %c0_150], %194 {strides = array<i32>} : memref<2x22x32xf32, #tpu.memory_space<vmem>>, vector<2x8x32xf32>,
      %cst_151 = arith.constant 0.000000e+00 : f32
      %196 = vector.broadcast %cst_151 : f32 to vector<2x4x32xf32>
      %c0_152 = arith.constant 0 : index
      %c18 = arith.constant 18 : index
      %c0_153 = arith.constant 0 : index
      %197 = vector.load %arg14[%c0_152, %c18, %c0_153] : memref<2x22x32xf32, #tpu.memory_space<vmem>>, vector<2x4x32xf32>
      tpu.vector_store %arg14[%c0_152, %c18, %c0_153], %196 {strides = array<i32>} : memref<2x22x32xf32, #tpu.memory_space<vmem>>, vector<2x4x32xf32>,
      %cst_154 = arith.constant 0.000000e+00 : f32
      %198 = vector.broadcast %cst_154 : f32 to vector<2x128xf32>
      %c0_155 = arith.constant 0 : index
      %c0_156 = arith.constant 0 : index
      %199 = vector.load %arg15[%c0_155, %c0_156] : memref<2x128xf32, #tpu.memory_space<vmem>>, vector<2x128xf32>
      tpu.vector_store %arg15[%c0_155, %c0_156], %198 {strides = array<i32>} : memref<2x128xf32, #tpu.memory_space<vmem>>, vector<2x128xf32>,
    } else {
    }
    %c0 = arith.constant 0 : index
    %c0_1 = arith.constant 0 : index
    %c0_2 = arith.constant 0 : index
    %c0_3 = arith.constant 0 : index
    %3 = vector.load %arg1[%c0, %c0_1, %c0_2, %c0_3] : memref<2x1x8x4xf32, #tpu.memory_space<vmem>>, vector<2x1x8x4xf32>
    %4 = vector.shape_cast %3 : vector<2x1x8x4xf32> to vector<2x8x4xf32>
    %c0_4 = arith.constant 0 : index
    %c8 = arith.constant 8 : index
    %c0_5 = arith.constant 0 : index
    %5 = vector.load %arg13[%c0_4, %c8, %c0_5] : memref<2x18x4xf32, #tpu.memory_space<vmem>>, vector<2x8x4xf32>
    tpu.vector_store %arg13[%c0_4, %c8, %c0_5], %4 {strides = array<i32>} : memref<2x18x4xf32, #tpu.memory_space<vmem>>, vector<2x8x4xf32>,
    %cst = arith.constant 0.000000e+00 : f32
    %6 = vector.broadcast %cst : f32 to vector<2x10x32xf32>
    %c0_6 = arith.constant 0 : index
    %c6 = arith.constant 6 : index
    %c0_7 = arith.constant 0 : index
    %7 = vector.load %arg13[%c0_6, %c6, %c0_7] : memref<2x18x4xf32, #tpu.memory_space<vmem>>, vector<2x10x4xf32>
    %c0_8 = arith.constant 0 : index
    %c0_9 = arith.constant 0 : index
    %c0_10 = arith.constant 0 : index
    %8 = vector.load %arg2[%c0_8, %c0_9, %c0_10] : memref<1x12x32xbf16, #tpu.memory_space<vmem>>, vector<1x4x32xbf16>
    %9 = vector.shape_cast %8 : vector<1x4x32xbf16> to vector<4x32xbf16>
    %10 = vector.shape_cast %9 : vector<4x32xbf16> to vector<1x4x32xbf16>
    %11 = vector.broadcast %10 : vector<1x4x32xbf16> to vector<2x4x32xbf16>
    %12 = arith.truncf %7 : vector<2x10x4xf32> to vector<2x10x4xbf16>
    %cst_11 = arith.constant dense<0.000000e+00> : vector<2x10x32xf32>
    %13 = tpu.matmul %12, %11, %cst_11 {dimension_numbers = #tpu.dot_dimension_numbers<[2], [1], [1], [2], [0, 0, 0, 1, 1, 2], [0], [0]>} : vector<2x10x4xbf16>, vector<2x4x32xbf16>, vector<2x10x32xf32> -> vector<2x10x32xf32>
    %14 = arith.addf %6, %13 : vector<2x10x32xf32>
    %c0_12 = arith.constant 0 : index
    %c7 = arith.constant 7 : index
    %c0_13 = arith.constant 0 : index
    %15 = vector.load %arg13[%c0_12, %c7, %c0_13] : memref<2x18x4xf32, #tpu.memory_space<vmem>>, vector<2x10x4xf32>
    %c0_14 = arith.constant 0 : index
    %c4 = arith.constant 4 : index
    %c0_15 = arith.constant 0 : index
    %16 = vector.load %arg2[%c0_14, %c4, %c0_15] : memref<1x12x32xbf16, #tpu.memory_space<vmem>>, vector<1x4x32xbf16>
    %17 = vector.shape_cast %16 : vector<1x4x32xbf16> to vector<4x32xbf16>
    %18 = vector.shape_cast %17 : vector<4x32xbf16> to vector<1x4x32xbf16>
    %19 = vector.broadcast %18 : vector<1x4x32xbf16> to vector<2x4x32xbf16>
    %20 = arith.truncf %15 : vector<2x10x4xf32> to vector<2x10x4xbf16>
    %cst_16 = arith.constant dense<0.000000e+00> : vector<2x10x32xf32>
    %21 = tpu.matmul %20, %19, %cst_16 {dimension_numbers = #tpu.dot_dimension_numbers<[2], [1], [1], [2], [0, 0, 0, 1, 1, 2], [0], [0]>} : vector<2x10x4xbf16>, vector<2x4x32xbf16>, vector<2x10x32xf32> -> vector<2x10x32xf32>
    %22 = arith.addf %14, %21 : vector<2x10x32xf32>
    %c0_17 = arith.constant 0 : index
    %c8_18 = arith.constant 8 : index
    %c0_19 = arith.constant 0 : index
    %23 = vector.load %arg13[%c0_17, %c8_18, %c0_19] : memref<2x18x4xf32, #tpu.memory_space<vmem>>, vector<2x10x4xf32>
    %c0_20 = arith.constant 0 : index
    %c8_21 = arith.constant 8 : index
    %c0_22 = arith.constant 0 : index
    %24 = vector.load %arg2[%c0_20, %c8_21, %c0_22] : memref<1x12x32xbf16, #tpu.memory_space<vmem>>, vector<1x4x32xbf16>
    %25 = vector.shape_cast %24 : vector<1x4x32xbf16> to vector<4x32xbf16>
    %26 = vector.shape_cast %25 : vector<4x32xbf16> to vector<1x4x32xbf16>
    %27 = vector.broadcast %26 : vector<1x4x32xbf16> to vector<2x4x32xbf16>
    %28 = arith.truncf %23 : vector<2x10x4xf32> to vector<2x10x4xbf16>
    %cst_23 = arith.constant dense<0.000000e+00> : vector<2x10x32xf32>
    %29 = tpu.matmul %28, %27, %cst_23 {dimension_numbers = #tpu.dot_dimension_numbers<[2], [1], [1], [2], [0, 0, 0, 1, 1, 2], [0], [0]>} : vector<2x10x4xbf16>, vector<2x4x32xbf16>, vector<2x10x32xf32> -> vector<2x10x32xf32>
    %30 = arith.addf %22, %29 : vector<2x10x32xf32>
    %c0_24 = arith.constant 0 : index
    %c0_25 = arith.constant 0 : index
    %c0_26 = arith.constant 0 : index
    %31 = vector.load %arg4[%c0_24, %c0_25, %c0_26] : memref<1x7x32xf32, #tpu.memory_space<vmem>>, vector<1x1x32xf32>
    %32 = vector.shape_cast %31 : vector<1x1x32xf32> to vector<1x32xf32>
    %33 = vector.shape_cast %32 : vector<1x32xf32> to vector<1x1x32xf32>
    %c0_27 = arith.constant 0 : index
    %c1 = arith.constant 1 : index
    %c0_28 = arith.constant 0 : index
    %34 = vector.load %arg4[%c0_27, %c1, %c0_28] : memref<1x7x32xf32, #tpu.memory_space<vmem>>, vector<1x1x32xf32>
    %35 = vector.shape_cast %34 : vector<1x1x32xf32> to vector<1x32xf32>
    %36 = vector.shape_cast %35 : vector<1x32xf32> to vector<1x1x32xf32>
    %c0_29 = arith.constant 0 : index
    %c2 = arith.constant 2 : index
    %c0_30 = arith.constant 0 : index
    %37 = vector.load %arg4[%c0_29, %c2, %c0_30] : memref<1x7x32xf32, #tpu.memory_space<vmem>>, vector<1x1x32xf32>
    %38 = vector.shape_cast %37 : vector<1x1x32xf32> to vector<1x32xf32>
    %39 = vector.shape_cast %38 : vector<1x32xf32> to vector<1x1x32xf32>
    %40 = vector.broadcast %33 : vector<1x1x32xf32> to vector<2x10x32xf32>
    %41 = arith.addf %30, %40 : vector<2x10x32xf32>
    %cst_31 = arith.constant 0.000000e+00 : f32
    %42 = vector.broadcast %cst_31 : f32 to vector<2x10x32xf32>
    %43 = arith.maximumf %41, %42 : vector<2x10x32xf32>
    %44 = vector.broadcast %36 : vector<1x1x32xf32> to vector<2x10x32xf32>
    %45 = arith.mulf %43, %44 : vector<2x10x32xf32>
    %46 = vector.broadcast %39 : vector<1x1x32xf32> to vector<2x10x32xf32>
    %47 = arith.addf %45, %46 : vector<2x10x32xf32>
    %c0_32 = arith.constant 0 : index
    %c8_33 = arith.constant 8 : index
    %c0_34 = arith.constant 0 : index
    %48 = vector.load %arg14[%c0_32, %c8_33, %c0_34] : memref<2x22x32xf32, #tpu.memory_space<vmem>>, vector<2x10x32xf32>
    tpu.vector_store %arg14[%c0_32, %c8_33, %c0_34], %47 {strides = array<i32>} : memref<2x22x32xf32, #tpu.memory_space<vmem>>, vector<2x10x32xf32>,
    %cst_35 = arith.constant 0.000000e+00 : f32
    %49 = vector.broadcast %cst_35 : f32 to vector<2x14x32xf32>
    %c0_36 = arith.constant 0 : index
    %c4_37 = arith.constant 4 : index
    %c0_38 = arith.constant 0 : index
    %50 = vector.load %arg14[%c0_36, %c4_37, %c0_38] : memref<2x22x32xf32, #tpu.memory_space<vmem>>, vector<2x14x32xf32>
    %c0_39 = arith.constant 0 : index
    %c0_40 = arith.constant 0 : index
    %c0_41 = arith.constant 0 : index
    %51 = vector.load %arg3[%c0_39, %c0_40, %c0_41] : memref<1x96x32xbf16, #tpu.memory_space<vmem>>, vector<1x32x32xbf16>
    %52 = vector.shape_cast %51 : vector<1x32x32xbf16> to vector<32x32xbf16>
    %53 = vector.shape_cast %52 : vector<32x32xbf16> to vector<1x32x32xbf16>
    %54 = vector.broadcast %53 : vector<1x32x32xbf16> to vector<2x32x32xbf16>
    %55 = arith.truncf %50 : vector<2x14x32xf32> to vector<2x14x32xbf16>
    %cst_42 = arith.constant dense<0.000000e+00> : vector<2x14x32xf32>
    %56 = tpu.matmul %55, %54, %cst_42 {dimension_numbers = #tpu.dot_dimension_numbers<[2], [1], [1], [2], [0, 0, 0, 1, 1, 2], [0], [0]>} : vector<2x14x32xbf16>, vector<2x32x32xbf16>, vector<2x14x32xf32> -> vector<2x14x32xf32>
    %57 = arith.addf %49, %56 : vector<2x14x32xf32>
    %c0_43 = arith.constant 0 : index
    %c6_44 = arith.constant 6 : index
    %c0_45 = arith.constant 0 : index
    %58 = vector.load %arg14[%c0_43, %c6_44, %c0_45] : memref<2x22x32xf32, #tpu.memory_space<vmem>>, vector<2x14x32xf32>
    %c0_46 = arith.constant 0 : index
    %c32 = arith.constant 32 : index
    %c0_47 = arith.constant 0 : index
    %59 = vector.load %arg3[%c0_46, %c32, %c0_47] : memref<1x96x32xbf16, #tpu.memory_space<vmem>>, vector<1x32x32xbf16>
    %60 = vector.shape_cast %59 : vector<1x32x32xbf16> to vector<32x32xbf16>
    %61 = vector.shape_cast %60 : vector<32x32xbf16> to vector<1x32x32xbf16>
    %62 = vector.broadcast %61 : vector<1x32x32xbf16> to vector<2x32x32xbf16>
    %63 = arith.truncf %58 : vector<2x14x32xf32> to vector<2x14x32xbf16>
    %cst_48 = arith.constant dense<0.000000e+00> : vector<2x14x32xf32>
    %64 = tpu.matmul %63, %62, %cst_48 {dimension_numbers = #tpu.dot_dimension_numbers<[2], [1], [1], [2], [0, 0, 0, 1, 1, 2], [0], [0]>} : vector<2x14x32xbf16>, vector<2x32x32xbf16>, vector<2x14x32xf32> -> vector<2x14x32xf32>
    %65 = arith.addf %57, %64 : vector<2x14x32xf32>
    %c0_49 = arith.constant 0 : index
    %c8_50 = arith.constant 8 : index
    %c0_51 = arith.constant 0 : index
    %66 = vector.load %arg14[%c0_49, %c8_50, %c0_51] : memref<2x22x32xf32, #tpu.memory_space<vmem>>, vector<2x14x32xf32>
    %c0_52 = arith.constant 0 : index
    %c64 = arith.constant 64 : index
    %c0_53 = arith.constant 0 : index
    %67 = vector.load %arg3[%c0_52, %c64, %c0_53] : memref<1x96x32xbf16, #tpu.memory_space<vmem>>, vector<1x32x32xbf16>
    %68 = vector.shape_cast %67 : vector<1x32x32xbf16> to vector<32x32xbf16>
    %69 = vector.shape_cast %68 : vector<32x32xbf16> to vector<1x32x32xbf16>
    %70 = vector.broadcast %69 : vector<1x32x32xbf16> to vector<2x32x32xbf16>
    %71 = arith.truncf %66 : vector<2x14x32xf32> to vector<2x14x32xbf16>
    %cst_54 = arith.constant dense<0.000000e+00> : vector<2x14x32xf32>
    %72 = tpu.matmul %71, %70, %cst_54 {dimension_numbers = #tpu.dot_dimension_numbers<[2], [1], [1], [2], [0, 0, 0, 1, 1, 2], [0], [0]>} : vector<2x14x32xbf16>, vector<2x32x32xbf16>, vector<2x14x32xf32> -> vector<2x14x32xf32>
    %73 = arith.addf %65, %72 : vector<2x14x32xf32>
    %c0_55 = arith.constant 0 : index
    %c3 = arith.constant 3 : index
    %c0_56 = arith.constant 0 : index
    %74 = vector.load %arg4[%c0_55, %c3, %c0_56] : memref<1x7x32xf32, #tpu.memory_space<vmem>>, vector<1x1x32xf32>
    %75 = vector.shape_cast %74 : vector<1x1x32xf32> to vector<1x32xf32>
    %76 = vector.shape_cast %75 : vector<1x32xf32> to vector<1x1x32xf32>
    %c0_57 = arith.constant 0 : index
    %c4_58 = arith.constant 4 : index
    %c0_59 = arith.constant 0 : index
    %77 = vector.load %arg4[%c0_57, %c4_58, %c0_59] : memref<1x7x32xf32, #tpu.memory_space<vmem>>, vector<1x1x32xf32>
    %78 = vector.shape_cast %77 : vector<1x1x32xf32> to vector<1x32xf32>
    %79 = vector.shape_cast %78 : vector<1x32xf32> to vector<1x1x32xf32>
    %c0_60 = arith.constant 0 : index
    %c5 = arith.constant 5 : index
    %c0_61 = arith.constant 0 : index
    %80 = vector.load %arg4[%c0_60, %c5, %c0_61] : memref<1x7x32xf32, #tpu.memory_space<vmem>>, vector<1x1x32xf32>
    %81 = vector.shape_cast %80 : vector<1x1x32xf32> to vector<1x32xf32>
    %82 = vector.shape_cast %81 : vector<1x32xf32> to vector<1x1x32xf32>
    %83 = vector.broadcast %76 : vector<1x1x32xf32> to vector<2x14x32xf32>
    %84 = arith.addf %73, %83 : vector<2x14x32xf32>
    %cst_62 = arith.constant 0.000000e+00 : f32
    %85 = vector.broadcast %cst_62 : f32 to vector<2x14x32xf32>
    %86 = arith.maximumf %84, %85 : vector<2x14x32xf32>
    %87 = vector.broadcast %79 : vector<1x1x32xf32> to vector<2x14x32xf32>
    %88 = arith.mulf %86, %87 : vector<2x14x32xf32>
    %89 = vector.broadcast %82 : vector<1x1x32xf32> to vector<2x14x32xf32>
    %90 = arith.addf %88, %89 : vector<2x14x32xf32>
    %c0_63 = arith.constant 0 : index
    %c6_64 = arith.constant 6 : index
    %c0_65 = arith.constant 0 : index
    %91 = vector.load %arg4[%c0_63, %c6_64, %c0_65] : memref<1x7x32xf32, #tpu.memory_space<vmem>>, vector<1x1x32xf32>
    %92 = vector.shape_cast %91 : vector<1x1x32xf32> to vector<1x32xf32>
    %93 = vector.shape_cast %92 : vector<1x32xf32> to vector<1x32xf32>
    %94 = vector.broadcast %93 : vector<1x32xf32> to vector<2x32xf32>
    %95 = arith.truncf %90 : vector<2x14x32xf32> to vector<2x14x32xbf16>
    %96 = vector.extract_strided_slice %95 {offsets = [0, 0, 0], sizes = [2, 1, 32], strides = [1, 1, 1]} : vector<2x14x32xbf16> to vector<2x1x32xbf16>
    %97 = vector.shape_cast %96 : vector<2x1x32xbf16> to vector<2x32xbf16>
    %c0_66 = arith.constant 0 : index
    %c0_67 = arith.constant 0 : index
    %c0_68 = arith.constant 0 : index
    %c0_69 = arith.constant 0 : index
    %98 = vector.load %arg5[%c0_66, %c0_67, %c0_68, %c0_69] : memref<1x14x32x32xbf16, #tpu.memory_space<vmem>>, vector<1x1x32x32xbf16>
    %99 = vector.shape_cast %98 : vector<1x1x32x32xbf16> to vector<32x32xbf16>
    %cst_70 = arith.constant dense<0.000000e+00> : vector<2x32xf32>
    %100 = tpu.matmul %97, %99, %cst_70 {dimension_numbers = #tpu.dot_dimension_numbers<[1], [0], [0], [1], [0, 0, 1, 1], [], []>} : vector<2x32xbf16>, vector<32x32xbf16>, vector<2x32xf32> -> vector<2x32xf32>
    %101 = arith.addf %94, %100 : vector<2x32xf32>
    %102 = vector.extract_strided_slice %95 {offsets = [0, 1, 0], sizes = [2, 1, 32], strides = [1, 1, 1]} : vector<2x14x32xbf16> to vector<2x1x32xbf16>
    %103 = vector.shape_cast %102 : vector<2x1x32xbf16> to vector<2x32xbf16>
    %c0_71 = arith.constant 0 : index
    %c1_72 = arith.constant 1 : index
    %c0_73 = arith.constant 0 : index
    %c0_74 = arith.constant 0 : index
    %104 = vector.load %arg5[%c0_71, %c1_72, %c0_73, %c0_74] : memref<1x14x32x32xbf16, #tpu.memory_space<vmem>>, vector<1x1x32x32xbf16>
    %105 = vector.shape_cast %104 : vector<1x1x32x32xbf16> to vector<32x32xbf16>
    %cst_75 = arith.constant dense<0.000000e+00> : vector<2x32xf32>
    %106 = tpu.matmul %103, %105, %cst_75 {dimension_numbers = #tpu.dot_dimension_numbers<[1], [0], [0], [1], [0, 0, 1, 1], [], []>} : vector<2x32xbf16>, vector<32x32xbf16>, vector<2x32xf32> -> vector<2x32xf32>
    %107 = arith.addf %101, %106 : vector<2x32xf32>
    %108 = vector.extract_strided_slice %95 {offsets = [0, 2, 0], sizes = [2, 1, 32], strides = [1, 1, 1]} : vector<2x14x32xbf16> to vector<2x1x32xbf16>
    %109 = vector.shape_cast %108 : vector<2x1x32xbf16> to vector<2x32xbf16>
    %c0_76 = arith.constant 0 : index
    %c2_77 = arith.constant 2 : index
    %c0_78 = arith.constant 0 : index
    %c0_79 = arith.constant 0 : index
    %110 = vector.load %arg5[%c0_76, %c2_77, %c0_78, %c0_79] : memref<1x14x32x32xbf16, #tpu.memory_space<vmem>>, vector<1x1x32x32xbf16>
    %111 = vector.shape_cast %110 : vector<1x1x32x32xbf16> to vector<32x32xbf16>
    %cst_80 = arith.constant dense<0.000000e+00> : vector<2x32xf32>
    %112 = tpu.matmul %109, %111, %cst_80 {dimension_numbers = #tpu.dot_dimension_numbers<[1], [0], [0], [1], [0, 0, 1, 1], [], []>} : vector<2x32xbf16>, vector<32x32xbf16>, vector<2x32xf32> -> vector<2x32xf32>
    %113 = arith.addf %107, %112 : vector<2x32xf32>
    %114 = vector.extract_strided_slice %95 {offsets = [0, 3, 0], sizes = [2, 1, 32], strides = [1, 1, 1]} : vector<2x14x32xbf16> to vector<2x1x32xbf16>
    %115 = vector.shape_cast %114 : vector<2x1x32xbf16> to vector<2x32xbf16>
    %c0_81 = arith.constant 0 : index
    %c3_82 = arith.constant 3 : index
    %c0_83 = arith.constant 0 : index
    %c0_84 = arith.constant 0 : index
    %116 = vector.load %arg5[%c0_81, %c3_82, %c0_83, %c0_84] : memref<1x14x32x32xbf16, #tpu.memory_space<vmem>>, vector<1x1x32x32xbf16>
    %117 = vector.shape_cast %116 : vector<1x1x32x32xbf16> to vector<32x32xbf16>
    %cst_85 = arith.constant dense<0.000000e+00> : vector<2x32xf32>
    %118 = tpu.matmul %115, %117, %cst_85 {dimension_numbers = #tpu.dot_dimension_numbers<[1], [0], [0], [1], [0, 0, 1, 1], [], []>} : vector<2x32xbf16>, vector<32x32xbf16>, vector<2x32xf32> -> vector<2x32xf32>
    %119 = arith.addf %113, %118 : vector<2x32xf32>
    %120 = vector.extract_strided_slice %95 {offsets = [0, 4, 0], sizes = [2, 1, 32], strides = [1, 1, 1]} : vector<2x14x32xbf16> to vector<2x1x32xbf16>
    %121 = vector.shape_cast %120 : vector<2x1x32xbf16> to vector<2x32xbf16>
    %c0_86 = arith.constant 0 : index
    %c4_87 = arith.constant 4 : index
    %c0_88 = arith.constant 0 : index
    %c0_89 = arith.constant 0 : index
    %122 = vector.load %arg5[%c0_86, %c4_87, %c0_88, %c0_89] : memref<1x14x32x32xbf16, #tpu.memory_space<vmem>>, vector<1x1x32x32xbf16>
    %123 = vector.shape_cast %122 : vector<1x1x32x32xbf16> to vector<32x32xbf16>
    %cst_90 = arith.constant dense<0.000000e+00> : vector<2x32xf32>
    %124 = tpu.matmul %121, %123, %cst_90 {dimension_numbers = #tpu.dot_dimension_numbers<[1], [0], [0], [1], [0, 0, 1, 1], [], []>} : vector<2x32xbf16>, vector<32x32xbf16>, vector<2x32xf32> -> vector<2x32xf32>
    %125 = arith.addf %119, %124 : vector<2x32xf32>
    %126 = vector.extract_strided_slice %95 {offsets = [0, 5, 0], sizes = [2, 1, 32], strides = [1, 1, 1]} : vector<2x14x32xbf16> to vector<2x1x32xbf16>
    %127 = vector.shape_cast %126 : vector<2x1x32xbf16> to vector<2x32xbf16>
    %c0_91 = arith.constant 0 : index
    %c5_92 = arith.constant 5 : index
    %c0_93 = arith.constant 0 : index
    %c0_94 = arith.constant 0 : index
    %128 = vector.load %arg5[%c0_91, %c5_92, %c0_93, %c0_94] : memref<1x14x32x32xbf16, #tpu.memory_space<vmem>>, vector<1x1x32x32xbf16>
    %129 = vector.shape_cast %128 : vector<1x1x32x32xbf16> to vector<32x32xbf16>
    %cst_95 = arith.constant dense<0.000000e+00> : vector<2x32xf32>
    %130 = tpu.matmul %127, %129, %cst_95 {dimension_numbers = #tpu.dot_dimension_numbers<[1], [0], [0], [1], [0, 0, 1, 1], [], []>} : vector<2x32xbf16>, vector<32x32xbf16>, vector<2x32xf32> -> vector<2x32xf32>
    %131 = arith.addf %125, %130 : vector<2x32xf32>
    %132 = vector.extract_strided_slice %95 {offsets = [0, 6, 0], sizes = [2, 1, 32], strides = [1, 1, 1]} : vector<2x14x32xbf16> to vector<2x1x32xbf16>
    %133 = vector.shape_cast %132 : vector<2x1x32xbf16> to vector<2x32xbf16>
    %c0_96 = arith.constant 0 : index
    %c6_97 = arith.constant 6 : index
    %c0_98 = arith.constant 0 : index
    %c0_99 = arith.constant 0 : index
    %134 = vector.load %arg5[%c0_96, %c6_97, %c0_98, %c0_99] : memref<1x14x32x32xbf16, #tpu.memory_space<vmem>>, vector<1x1x32x32xbf16>
    %135 = vector.shape_cast %134 : vector<1x1x32x32xbf16> to vector<32x32xbf16>
    %cst_100 = arith.constant dense<0.000000e+00> : vector<2x32xf32>
    %136 = tpu.matmul %133, %135, %cst_100 {dimension_numbers = #tpu.dot_dimension_numbers<[1], [0], [0], [1], [0, 0, 1, 1], [], []>} : vector<2x32xbf16>, vector<32x32xbf16>, vector<2x32xf32> -> vector<2x32xf32>
    %137 = arith.addf %131, %136 : vector<2x32xf32>
    %138 = vector.extract_strided_slice %95 {offsets = [0, 7, 0], sizes = [2, 1, 32], strides = [1, 1, 1]} : vector<2x14x32xbf16> to vector<2x1x32xbf16>
    %139 = vector.shape_cast %138 : vector<2x1x32xbf16> to vector<2x32xbf16>
    %c0_101 = arith.constant 0 : index
    %c7_102 = arith.constant 7 : index
    %c0_103 = arith.constant 0 : index
    %c0_104 = arith.constant 0 : index
    %140 = vector.load %arg5[%c0_101, %c7_102, %c0_103, %c0_104] : memref<1x14x32x32xbf16, #tpu.memory_space<vmem>>, vector<1x1x32x32xbf16>
    %141 = vector.shape_cast %140 : vector<1x1x32x32xbf16> to vector<32x32xbf16>
    %cst_105 = arith.constant dense<0.000000e+00> : vector<2x32xf32>
    %142 = tpu.matmul %139, %141, %cst_105 {dimension_numbers = #tpu.dot_dimension_numbers<[1], [0], [0], [1], [0, 0, 1, 1], [], []>} : vector<2x32xbf16>, vector<32x32xbf16>, vector<2x32xf32> -> vector<2x32xf32>
    %143 = arith.addf %137, %142 : vector<2x32xf32>
    %144 = vector.extract_strided_slice %95 {offsets = [0, 8, 0], sizes = [2, 1, 32], strides = [1, 1, 1]} : vector<2x14x32xbf16> to vector<2x1x32xbf16>
    %145 = vector.shape_cast %144 : vector<2x1x32xbf16> to vector<2x32xbf16>
    %c0_106 = arith.constant 0 : index
    %c8_107 = arith.constant 8 : index
    %c0_108 = arith.constant 0 : index
    %c0_109 = arith.constant 0 : index
    %146 = vector.load %arg5[%c0_106, %c8_107, %c0_108, %c0_109] : memref<1x14x32x32xbf16, #tpu.memory_space<vmem>>, vector<1x1x32x32xbf16>
    %147 = vector.shape_cast %146 : vector<1x1x32x32xbf16> to vector<32x32xbf16>
    %cst_110 = arith.constant dense<0.000000e+00> : vector<2x32xf32>
    %148 = tpu.matmul %145, %147, %cst_110 {dimension_numbers = #tpu.dot_dimension_numbers<[1], [0], [0], [1], [0, 0, 1, 1], [], []>} : vector<2x32xbf16>, vector<32x32xbf16>, vector<2x32xf32> -> vector<2x32xf32>
    %149 = arith.addf %143, %148 : vector<2x32xf32>
    %150 = vector.extract_strided_slice %95 {offsets = [0, 9, 0], sizes = [2, 1, 32], strides = [1, 1, 1]} : vector<2x14x32xbf16> to vector<2x1x32xbf16>
    %151 = vector.shape_cast %150 : vector<2x1x32xbf16> to vector<2x32xbf16>
    %c0_111 = arith.constant 0 : index
    %c9 = arith.constant 9 : index
    %c0_112 = arith.constant 0 : index
    %c0_113 = arith.constant 0 : index
    %152 = vector.load %arg5[%c0_111, %c9, %c0_112, %c0_113] : memref<1x14x32x32xbf16, #tpu.memory_space<vmem>>, vector<1x1x32x32xbf16>
    %153 = vector.shape_cast %152 : vector<1x1x32x32xbf16> to vector<32x32xbf16>
    %cst_114 = arith.constant dense<0.000000e+00> : vector<2x32xf32>
    %154 = tpu.matmul %151, %153, %cst_114 {dimension_numbers = #tpu.dot_dimension_numbers<[1], [0], [0], [1], [0, 0, 1, 1], [], []>} : vector<2x32xbf16>, vector<32x32xbf16>, vector<2x32xf32> -> vector<2x32xf32>
    %155 = arith.addf %149, %154 : vector<2x32xf32>
    %156 = vector.extract_strided_slice %95 {offsets = [0, 10, 0], sizes = [2, 1, 32], strides = [1, 1, 1]} : vector<2x14x32xbf16> to vector<2x1x32xbf16>
    %157 = vector.shape_cast %156 : vector<2x1x32xbf16> to vector<2x32xbf16>
    %c0_115 = arith.constant 0 : index
    %c10 = arith.constant 10 : index
    %c0_116 = arith.constant 0 : index
    %c0_117 = arith.constant 0 : index
    %158 = vector.load %arg5[%c0_115, %c10, %c0_116, %c0_117] : memref<1x14x32x32xbf16, #tpu.memory_space<vmem>>, vector<1x1x32x32xbf16>
    %159 = vector.shape_cast %158 : vector<1x1x32x32xbf16> to vector<32x32xbf16>
    %cst_118 = arith.constant dense<0.000000e+00> : vector<2x32xf32>
    %160 = tpu.matmul %157, %159, %cst_118 {dimension_numbers = #tpu.dot_dimension_numbers<[1], [0], [0], [1], [0, 0, 1, 1], [], []>} : vector<2x32xbf16>, vector<32x32xbf16>, vector<2x32xf32> -> vector<2x32xf32>
    %161 = arith.addf %155, %160 : vector<2x32xf32>
    %162 = vector.extract_strided_slice %95 {offsets = [0, 11, 0], sizes = [2, 1, 32], strides = [1, 1, 1]} : vector<2x14x32xbf16> to vector<2x1x32xbf16>
    %163 = vector.shape_cast %162 : vector<2x1x32xbf16> to vector<2x32xbf16>
    %c0_119 = arith.constant 0 : index
    %c11 = arith.constant 11 : index
    %c0_120 = arith.constant 0 : index
    %c0_121 = arith.constant 0 : index
    %164 = vector.load %arg5[%c0_119, %c11, %c0_120, %c0_121] : memref<1x14x32x32xbf16, #tpu.memory_space<vmem>>, vector<1x1x32x32xbf16>
    %165 = vector.shape_cast %164 : vector<1x1x32x32xbf16> to vector<32x32xbf16>
    %cst_122 = arith.constant dense<0.000000e+00> : vector<2x32xf32>
    %166 = tpu.matmul %163, %165, %cst_122 {dimension_numbers = #tpu.dot_dimension_numbers<[1], [0], [0], [1], [0, 0, 1, 1], [], []>} : vector<2x32xbf16>, vector<32x32xbf16>, vector<2x32xf32> -> vector<2x32xf32>
    %167 = arith.addf %161, %166 : vector<2x32xf32>
    %168 = vector.extract_strided_slice %95 {offsets = [0, 12, 0], sizes = [2, 1, 32], strides = [1, 1, 1]} : vector<2x14x32xbf16> to vector<2x1x32xbf16>
    %169 = vector.shape_cast %168 : vector<2x1x32xbf16> to vector<2x32xbf16>
    %c0_123 = arith.constant 0 : index
    %c12 = arith.constant 12 : index
    %c0_124 = arith.constant 0 : index
    %c0_125 = arith.constant 0 : index
    %170 = vector.load %arg5[%c0_123, %c12, %c0_124, %c0_125] : memref<1x14x32x32xbf16, #tpu.memory_space<vmem>>, vector<1x1x32x32xbf16>
    %171 = vector.shape_cast %170 : vector<1x1x32x32xbf16> to vector<32x32xbf16>
    %cst_126 = arith.constant dense<0.000000e+00> : vector<2x32xf32>
    %172 = tpu.matmul %169, %171, %cst_126 {dimension_numbers = #tpu.dot_dimension_numbers<[1], [0], [0], [1], [0, 0, 1, 1], [], []>} : vector<2x32xbf16>, vector<32x32xbf16>, vector<2x32xf32> -> vector<2x32xf32>
    %173 = arith.addf %167, %172 : vector<2x32xf32>
    %174 = vector.extract_strided_slice %95 {offsets = [0, 13, 0], sizes = [2, 1, 32], strides = [1, 1, 1]} : vector<2x14x32xbf16> to vector<2x1x32xbf16>
    %175 = vector.shape_cast %174 : vector<2x1x32xbf16> to vector<2x32xbf16>
    %c0_127 = arith.constant 0 : index
    %c13 = arith.constant 13 : index
    %c0_128 = arith.constant 0 : index
    %c0_129 = arith.constant 0 : index
    %176 = vector.load %arg5[%c0_127, %c13, %c0_128, %c0_129] : memref<1x14x32x32xbf16, #tpu.memory_space<vmem>>, vector<1x1x32x32xbf16>
    %177 = vector.shape_cast %176 : vector<1x1x32x32xbf16> to vector<32x32xbf16>
    %cst_130 = arith.constant dense<0.000000e+00> : vector<2x32xf32>
    %178 = tpu.matmul %175, %177, %cst_130 {dimension_numbers = #tpu.dot_dimension_numbers<[1], [0], [0], [1], [0, 0, 1, 1], [], []>} : vector<2x32xbf16>, vector<32x32xbf16>, vector<2x32xf32> -> vector<2x32xf32>
    %179 = arith.addf %173, %178 : vector<2x32xf32>
    %c0_131 = arith.constant 0 : index
    %c0_132 = arith.constant 0 : index
    %180 = vector.load %arg15[%c0_131, %c0_132] : memref<2x128xf32, #tpu.memory_space<vmem>>, vector<2x128xf32>
    %181 = arith.truncf %179 : vector<2x32xf32> to vector<2x32xbf16>
    %c0_133 = arith.constant 0 : index
    %c0_134 = arith.constant 0 : index
    %c0_135 = arith.constant 0 : index
    %182 = vector.load %arg6[%c0_133, %c0_134, %c0_135] : memref<1x32x128xbf16, #tpu.memory_space<vmem>>, vector<1x32x128xbf16>
    %183 = vector.shape_cast %182 : vector<1x32x128xbf16> to vector<32x128xbf16>
    %cst_136 = arith.constant dense<0.000000e+00> : vector<2x128xf32>
    %184 = tpu.matmul %181, %183, %cst_136 {dimension_numbers = #tpu.dot_dimension_numbers<[1], [0], [0], [1], [0, 0, 1, 1], [], []>} : vector<2x32xbf16>, vector<32x128xbf16>, vector<2x128xf32> -> vector<2x128xf32>
    %185 = arith.addf %180, %184 : vector<2x128xf32>
    %c0_137 = arith.constant 0 : index
    %c0_138 = arith.constant 0 : index
    %186 = vector.load %arg15[%c0_137, %c0_138] : memref<2x128xf32, #tpu.memory_space<vmem>>, vector<2x128xf32>
    tpu.vector_store %arg15[%c0_137, %c0_138], %185 {strides = array<i32>} : memref<2x128xf32, #tpu.memory_space<vmem>>, vector<2x128xf32>,
    %c1_i32 = arith.constant 1 : i32
    %187 = arith.cmpi eq, %arg0, %c1_i32 : i32
    %188 = arith.extui %187 : i1 to i32
    %c0_i32_139 = arith.constant 0 : i32
    %189 = arith.cmpi ne, %188, %c0_i32_139 : i32
    scf.if %189 {
      %c0_140 = arith.constant 0 : index
      %c0_141 = arith.constant 0 : index
      %190 = vector.load %arg15[%c0_140, %c0_141] : memref<2x128xf32, #tpu.memory_space<vmem>>, vector<2x128xf32>
      %c0_142 = arith.constant 0 : index
      %c0_143 = arith.constant 0 : index
      %191 = vector.load %arg7[%c0_142, %c0_143] : memref<1x128xf32, #tpu.memory_space<vmem>>, vector<1x128xf32>
      %192 = vector.broadcast %191 : vector<1x128xf32> to vector<2x128xf32>
      %193 = arith.addf %190, %192 : vector<2x128xf32>
      %cst_144 = arith.constant 0.000000e+00 : f32
      %194 = vector.broadcast %cst_144 : f32 to vector<2x128xf32>
      %195 = arith.maximumf %193, %194 : vector<2x128xf32>
      %196 = arith.truncf %195 : vector<2x128xf32> to vector<2x128xbf16>
      %c0_145 = arith.constant 0 : index
      %c0_146 = arith.constant 0 : index
      %197 = vector.load %arg8[%c0_145, %c0_146] : memref<128x128xbf16, #tpu.memory_space<vmem>>, vector<128x128xbf16>
      %cst_147 = arith.constant dense<0.000000e+00> : vector<2x128xf32>
      %198 = tpu.matmul %196, %197, %cst_147 {dimension_numbers = #tpu.dot_dimension_numbers<[1], [0], [0], [1], [0, 0, 1, 1], [], []>} : vector<2x128xbf16>, vector<128x128xbf16>, vector<2x128xf32> -> vector<2x128xf32>
      %c0_148 = arith.constant 0 : index
      %c0_149 = arith.constant 0 : index
      %199 = vector.load %arg9[%c0_148, %c0_149] : memref<1x128xf32, #tpu.memory_space<vmem>>, vector<1x128xf32>
      %200 = vector.broadcast %199 : vector<1x128xf32> to vector<2x128xf32>
      %201 = arith.addf %198, %200 : vector<2x128xf32>
      %cst_150 = arith.constant 0.000000e+00 : f32
      %202 = vector.broadcast %cst_150 : f32 to vector<2x128xf32>
      %203 = arith.maximumf %201, %202 : vector<2x128xf32>
      %204 = arith.truncf %203 : vector<2x128xf32> to vector<2x128xbf16>
      %c0_151 = arith.constant 0 : index
      %c0_152 = arith.constant 0 : index
      %205 = vector.load %arg10[%c0_151, %c0_152] : memref<128x16xbf16, #tpu.memory_space<vmem>>, vector<128x16xbf16>
      %cst_153 = arith.constant dense<0.000000e+00> : vector<2x16xf32>
      %206 = tpu.matmul %204, %205, %cst_153 {dimension_numbers = #tpu.dot_dimension_numbers<[1], [0], [0], [1], [0, 0, 1, 1], [], []>} : vector<2x128xbf16>, vector<128x16xbf16>, vector<2x16xf32> -> vector<2x16xf32>
      %c0_154 = arith.constant 0 : index
      %c0_155 = arith.constant 0 : index
      %207 = vector.load %arg11[%c0_154, %c0_155] : memref<1x16xf32, #tpu.memory_space<vmem>>, vector<1x16xf32>
      %208 = vector.broadcast %207 : vector<1x16xf32> to vector<2x16xf32>
      %209 = arith.addf %206, %208 : vector<2x16xf32>
      %c0_156 = arith.constant 0 : index
      %c0_157 = arith.constant 0 : index
      %210 = vector.load %arg12[%c0_156, %c0_157] : memref<2x16xf32, #tpu.memory_space<vmem>>, vector<2x16xf32>
      tpu.vector_store %arg12[%c0_156, %c0_157], %209 {strides = array<i32>} : memref<2x16xf32, #tpu.memory_space<vmem>>, vector<2x16xf32>,
    } else {
    }
    return
  }
  func.func @transform_0(%arg0: i32) -> (i32, i32, i32, i32) {
    %c0_i32 = arith.constant 0 : i32
    %c0_i32_0 = arith.constant 0 : i32
    %c0_i32_1 = arith.constant 0 : i32
    %c0_i32_2 = arith.constant 0 : i32
    return %c0_i32, %arg0, %c0_i32_0, %c0_i32_1 : i32, i32, i32, i32
  }
  func.func @transform_1(%arg0: i32) -> (i32, i32, i32) {
    %c0_i32 = arith.constant 0 : i32
    %c0_i32_0 = arith.constant 0 : i32
    %c0_i32_1 = arith.constant 0 : i32
    return %arg0, %c0_i32, %c0_i32_0 : i32, i32, i32
  }
  func.func @transform_2(%arg0: i32) -> (i32, i32, i32) {
    %c0_i32 = arith.constant 0 : i32
    %c0_i32_0 = arith.constant 0 : i32
    %c0_i32_1 = arith.constant 0 : i32
    return %arg0, %c0_i32, %c0_i32_0 : i32, i32, i32
  }
  func.func @transform_3(%arg0: i32) -> (i32, i32, i32) {
    %c0_i32 = arith.constant 0 : i32
    %c0_i32_0 = arith.constant 0 : i32
    %c0_i32_1 = arith.constant 0 : i32
    return %arg0, %c0_i32, %c0_i32_0 : i32, i32, i32
  }
  func.func @transform_4(%arg0: i32) -> (i32, i32, i32, i32) {
    %c0_i32 = arith.constant 0 : i32
    %c0_i32_0 = arith.constant 0 : i32
    %c0_i32_1 = arith.constant 0 : i32
    %c0_i32_2 = arith.constant 0 : i32
    return %arg0, %c0_i32, %c0_i32_0, %c0_i32_1 : i32, i32, i32, i32
  }
  func.func @transform_5(%arg0: i32) -> (i32, i32, i32) {
    %c0_i32 = arith.constant 0 : i32
    %c0_i32_0 = arith.constant 0 : i32
    %c0_i32_1 = arith.constant 0 : i32
    return %arg0, %c0_i32, %c0_i32_0 : i32, i32, i32
  }
  func.func @transform_6(%arg0: i32) -> (i32, i32) {
    %c0_i32 = arith.constant 0 : i32
    %c0_i32_0 = arith.constant 0 : i32
    %c0_i32_1 = arith.constant 0 : i32
    return %c0_i32, %c0_i32_0 : i32, i32
  }
  func.func @transform_7(%arg0: i32) -> (i32, i32) {
    %c0_i32 = arith.constant 0 : i32
    %c0_i32_0 = arith.constant 0 : i32
    %c0_i32_1 = arith.constant 0 : i32
    return %c0_i32, %c0_i32_0 : i32, i32
  }
  func.func @transform_8(%arg0: i32) -> (i32, i32) {
    %c0_i32 = arith.constant 0 : i32
    %c0_i32_0 = arith.constant 0 : i32
    %c0_i32_1 = arith.constant 0 : i32
    return %c0_i32, %c0_i32_0 : i32, i32
  }
  func.func @transform_9(%arg0: i32) -> (i32, i32) {
    %c0_i32 = arith.constant 0 : i32
    %c0_i32_0 = arith.constant 0 : i32
    %c0_i32_1 = arith.constant 0 : i32
    return %c0_i32, %c0_i32_0 : i32, i32
  }
  func.func @transform_10(%arg0: i32) -> (i32, i32) {
    %c0_i32 = arith.constant 0 : i32
    %c0_i32_0 = arith.constant 0 : i32
    %c0_i32_1 = arith.constant 0 : i32
    return %c0_i32, %c0_i32_0 : i32, i32
  }
  func.func @transform_11(%arg0: i32) -> (i32, i32) {
    %c0_i32 = arith.constant 0 : i32
    %c0_i32_0 = arith.constant 0 : i32
    %c0_i32_1 = arith.constant 0 : i32
    return %c0_i32, %c0_i32_0 : i32, i32
  }
}

</mosaic_0001>

<llo_original>
// kernel: _lambda_.1
$region0: #{_lambda_.1}
  #allocation0 [shape = 'u32[]', space=smem, size = 0x4, offset = 0x4, fixed_abs, tag = 'smem constant byte address 0x4 - core index']
  #allocation1 [shape = 'u32[72,128]{1,0:T(1,128)}', space=vmem, size = 0x9000, scoped, tag = 'internal scratch']
  #allocation2 [shape = 'f32[2,18,4]{2,1,0:T(8,128)}', space=vmem, size = 0x6000, scoped, tag = 'scratch operand']
  #allocation3 [shape = 'f32[2,22,32]{2,1,0:T(8,128)}', space=vmem, size = 0x6000, scoped, tag = 'scratch operand']
  #allocation4 [shape = 'f32[2,128]{1,0:T(2,128)}', space=vmem, size = 0x400, scoped, tag = 'scratch operand']
  %s0 = inlined_call_operand.vmem [shape: f32[2,2,8,4], index: 0, kind: input, shape index: {}]
  %s1 = inlined_call_operand.vmem [shape: bf16[2,12,32], index: 1, kind: input, shape index: {}]
  %s2 = inlined_call_operand.vmem [shape: bf16[2,96,32], index: 2, kind: input, shape index: {}]
  %s3 = inlined_call_operand.vmem [shape: f32[2,7,32], index: 3, kind: input, shape index: {}]
  %s4 = inlined_call_operand.hbm [shape: bf16[2,14,32,32], index: 4, kind: input, shape index: {}]
  %s5 = inlined_call_operand.vmem [shape: bf16[2,32,128], index: 5, kind: input, shape index: {}]
  %s6 = inlined_call_operand.vmem [shape: f32[1,128], index: 6, kind: input, shape index: {}]
  %s7 = inlined_call_operand.vmem [shape: bf16[128,128], index: 7, kind: input, shape index: {}]
  %s8 = inlined_call_operand.vmem [shape: f32[1,128], index: 8, kind: input, shape index: {}]
  %s9 = inlined_call_operand.vmem [shape: bf16[128,16], index: 9, kind: input, shape index: {}]
  %s10 = inlined_call_operand.vmem [shape: f32[1,16], index: 10, kind: input, shape index: {}]
  %s11 = inlined_call_operand.hbm [shape: f32[2,16], index: 11, kind: output, shape index: {}]
  %s12 = sld [smem:[#allocation0]]
  $region127: #{_lambda_.1} parent=0
    _
  %s14 = ssub.s32 1, %s12
  %s15 = scalar_select 0, %s14, %s12
  $region1: #{_lambda_.1} parent=0
    #allocation5 [shape = 'u8[16384]{0}', space=vmem, size = 0x4000, scoped, tag = 'input window, operand 0']
    #allocation6 [shape = 'u8[229376]{0}', space=vmem, size = 0x38000, scoped, tag = 'input window, operand 4']
    #allocation7 [shape = 's32[2]{0}', space=sflag, size = 0x8, scoped, tag = 'scoped memory for _lambda_.1']
    #allocation8 [shape = 's32[2]{0}', space=sflag, size = 0x8, scoped, tag = 'scoped memory for _lambda_.1']
    #allocation9 [shape = 'u8[1024]{0}', space=vmem, size = 0x400, scoped, tag = 'output window, operand 0, single buffered']
    %16 = vsyncpa [#allocation7], 0
    %s17 = scalar_lea.sflag [#allocation7], 1
    %18 = vsyncpa %s17, 0
    %19 = vsyncpa [#allocation8], 0
    loop: start=0, step=1, limit=4
    $region2: #{_lambda_.1} parent=1 // loop_pre_header
      _
    $region3: #{_lambda_.1} parent=1 // loop_header
      %s21 = sphi 0, %s25
      %p22 = scmp.ge.s32.totalorder %s21, 4
      %s31 = sphi 0, %s33
      %s34 = sphi 0, %s31
      %s35 = sphi 0, %s34
      %s51 = sphi 0, %s35
      %s57 = sphi 0, %s59
      %s60 = sphi 0, %s57
      %s61 = sphi 0, %s60
      %s77 = sphi 0, %s61
      %s83 = sphi 0, %s85
      %s86 = sphi 0, %s83
      %s87 = sphi 0, %s86
      %s103 = sphi 0, %s87
      %s109 = sphi 0, %s111
      %s112 = sphi 0, %s109
      %s113 = sphi 0, %s112
      %s129 = sphi 0, %s113
      %s135 = sphi 0, %s137
      %s138 = sphi 0, %s135
      %s139 = sphi 0, %s138
      %s155 = sphi 0, %s139
      %s161 = sphi 0, %s163
      %s164 = sphi 0, %s161
      %s165 = sphi 0, %s164
      %s181 = sphi 0, %s165
      %s185 = sphi 0, %s185
      %s187 = sphi 0, %s185
      %s188 = sphi 0, %s187
      %s202 = sphi 0, %s188
      %s206 = sphi 0, %s206
      %s208 = sphi 0, %s206
      %s209 = sphi 0, %s208
      %s223 = sphi 0, %s209
      %s227 = sphi 0, %s227
      %s229 = sphi 0, %s227
      %s230 = sphi 0, %s229
      %s244 = sphi 0, %s230
      %s248 = sphi 0, %s248
      %s250 = sphi 0, %s248
      %s251 = sphi 0, %s250
      %s265 = sphi 0, %s251
      %s269 = sphi 0, %s269
      %s271 = sphi 0, %s269
      %s272 = sphi 0, %s271
      %s286 = sphi 0, %s272
      %s290 = sphi 0, %s290
      %s292 = sphi 0, %s290
      %s293 = sphi 0, %s292
      %s307 = sphi 0, %s293
    $region4: #{_lambda_.1} parent=1 // loop_header_branch
      %24 = sbr.rel (%p22) target = $region8
    $region5: #{_lambda_.1} parent=1 // loop_body
      %s26 = ssub.s32 %s21, 1
      %s27 = ssub.s32 %s21, 2
      %s28 = sadd.s32 %s21, 1
      %s29 = ssub.s32 %s21, %s28
      %p30 = scmp.eq.s32.totalorder %s29, 0
      %s32 = sadd.s32 %s31, 1
      %s33 = scalar_select %p30, %s31, %s32
      %p36 = pneg %p30
      %p37 = scmp.eq.s32.totalorder %s21, 1
      %p38 = por %p36, %p37
      %p39 = scmp.ne.s32.totalorder %s31, %s34
      %p40 = scmp.eq.s32.totalorder %s21, 0
      %p41 = por %p39, %p40
      %p42 = scmp.ne.s32.totalorder %s31, %s34
      %p43 = scmp.eq.s32.totalorder %s26, 1
      %p44 = por %p42, %p43
      %p45 = scmp.ne.s32.totalorder %s34, %s35
      %p46 = scmp.eq.s32.totalorder %s26, 0
      %p47 = por %p45, %p46
      %p48 = scmp.ne.s32.totalorder %s34, %s35
      %p49 = scmp.eq.s32.totalorder %s27, 1
      %p50 = por %p48, %p49
      %p52 = scmp.ne.s32.totalorder %s35, %s51
      %p53 = scmp.eq.s32.totalorder %s27, 0
      %p54 = por %p52, %p53
      %s55 = ssub.s32 %s21, %s28
      %p56 = scmp.eq.s32.totalorder %s55, 0
      %s58 = sadd.s32 %s57, 1
      %s59 = scalar_select %p56, %s57, %s58
      %p62 = pneg %p56
      %p63 = scmp.eq.s32.totalorder %s21, 1
      %p64 = por %p62, %p63
      %p65 = scmp.ne.s32.totalorder %s57, %s60
      %p66 = scmp.eq.s32.totalorder %s21, 0
      %p67 = por %p65, %p66
      %p68 = scmp.ne.s32.totalorder %s57, %s60
      %p69 = scmp.eq.s32.totalorder %s26, 1
      %p70 = por %p68, %p69
      %p71 = scmp.ne.s32.totalorder %s60, %s61
      %p72 = scmp.eq.s32.totalorder %s26, 0
      %p73 = por %p71, %p72
      %p74 = scmp.ne.s32.totalorder %s60, %s61
      %p75 = scmp.eq.s32.totalorder %s27, 1
      %p76 = por %p74, %p75
      %p78 = scmp.ne.s32.totalorder %s61, %s77
      %p79 = scmp.eq.s32.totalorder %s27, 0
      %p80 = por %p78, %p79
      %s81 = ssub.s32 %s21, %s28
      %p82 = scmp.eq.s32.totalorder %s81, 0
      %s84 = sadd.s32 %s83, 1
      %s85 = scalar_select %p82, %s83, %s84
      %p88 = pneg %p82
      %p89 = scmp.eq.s32.totalorder %s21, 1
      %p90 = por %p88, %p89
      %p91 = scmp.ne.s32.totalorder %s83, %s86
      %p92 = scmp.eq.s32.totalorder %s21, 0
      %p93 = por %p91, %p92
      %p94 = scmp.ne.s32.totalorder %s83, %s86
      %p95 = scmp.eq.s32.totalorder %s26, 1
      %p96 = por %p94, %p95
      %p97 = scmp.ne.s32.totalorder %s86, %s87
      %p98 = scmp.eq.s32.totalorder %s26, 0
      %p99 = por %p97, %p98
      %p100 = scmp.ne.s32.totalorder %s86, %s87
      %p101 = scmp.eq.s32.totalorder %s27, 1
      %p102 = por %p100, %p101
      %p104 = scmp.ne.s32.totalorder %s87, %s103
      %p105 = scmp.eq.s32.totalorder %s27, 0
      %p106 = por %p104, %p105
      %s107 = ssub.s32 %s21, %s28
      %p108 = scmp.eq.s32.totalorder %s107, 0
      %s110 = sadd.s32 %s109, 1
      %s111 = scalar_select %p108, %s109, %s110
      %p114 = pneg %p108
      %p115 = scmp.eq.s32.totalorder %s21, 1
      %p116 = por %p114, %p115
      %p117 = scmp.ne.s32.totalorder %s109, %s112
      %p118 = scmp.eq.s32.totalorder %s21, 0
      %p119 = por %p117, %p118
      %p120 = scmp.ne.s32.totalorder %s109, %s112
      %p121 = scmp.eq.s32.totalorder %s26, 1
      %p122 = por %p120, %p121
      %p123 = scmp.ne.s32.totalorder %s112, %s113
      %p124 = scmp.eq.s32.totalorder %s26, 0
      %p125 = por %p123, %p124
      %p126 = scmp.ne.s32.totalorder %s112, %s113
      %p127 = scmp.eq.s32.totalorder %s27, 1
      %p128 = por %p126, %p127
      %p130 = scmp.ne.s32.totalorder %s113, %s129
      %p131 = scmp.eq.s32.totalorder %s27, 0
      %p132 = por %p130, %p131
      %s133 = ssub.s32 %s21, %s28
      %p134 = scmp.eq.s32.totalorder %s133, 0
      %s136 = sadd.s32 %s135, 1
      %s137 = scalar_select %p134, %s135, %s136
      %p140 = pneg %p134
      %p141 = scmp.eq.s32.totalorder %s21, 1
      %p142 = por %p140, %p141
      %p143 = scmp.ne.s32.totalorder %s135, %s138
      %p144 = scmp.eq.s32.totalorder %s21, 0
      %p145 = por %p143, %p144
      %p146 = scmp.ne.s32.totalorder %s135, %s138
      %p147 = scmp.eq.s32.totalorder %s26, 1
      %p148 = por %p146, %p147
      %p149 = scmp.ne.s32.totalorder %s138, %s139
      %p150 = scmp.eq.s32.totalorder %s26, 0
      %p151 = por %p149, %p150
      %p152 = scmp.ne.s32.totalorder %s138, %s139
      %p153 = scmp.eq.s32.totalorder %s27, 1
      %p154 = por %p152, %p153
      %p156 = scmp.ne.s32.totalorder %s139, %s155
      %p157 = scmp.eq.s32.totalorder %s27, 0
      %p158 = por %p156, %p157
      %s159 = ssub.s32 %s21, %s28
      %p160 = scmp.eq.s32.totalorder %s159, 0
      %s162 = sadd.s32 %s161, 1
      %s163 = scalar_select %p160, %s161, %s162
      %p166 = pneg %p160
      %p167 = scmp.eq.s32.totalorder %s21, 1
      %p168 = por %p166, %p167
      %p169 = scmp.ne.s32.totalorder %s161, %s164
      %p170 = scmp.eq.s32.totalorder %s21, 0
      %p171 = por %p169, %p170
      %p172 = scmp.ne.s32.totalorder %s161, %s164
      %p173 = scmp.eq.s32.totalorder %s26, 1
      %p174 = por %p172, %p173
      %p175 = scmp.ne.s32.totalorder %s164, %s165
      %p176 = scmp.eq.s32.totalorder %s26, 0
      %p177 = por %p175, %p176
      %p178 = scmp.ne.s32.totalorder %s164, %s165
      %p179 = scmp.eq.s32.totalorder %s27, 1
      %p180 = por %p178, %p179
      %p182 = scmp.ne.s32.totalorder %s165, %s181
      %p183 = scmp.eq.s32.totalorder %s27, 0
      %p184 = por %p182, %p183
      %s186 = sadd.s32 %s185, 1
      %p189 = scmp.eq.s32.totalorder %s21, 1
      %p190 = scmp.ne.s32.totalorder %s185, %s187
      %p191 = scmp.eq.s32.totalorder %s21, 0
      %p192 = por %p190, %p191
      %p193 = scmp.ne.s32.totalorder %s185, %s187
      %p194 = scmp.eq.s32.totalorder %s26, 1
      %p195 = por %p193, %p194
      %p196 = scmp.ne.s32.totalorder %s187, %s188
      %p197 = scmp.eq.s32.totalorder %s26, 0
      %p198 = por %p196, %p197
      %p199 = scmp.ne.s32.totalorder %s187, %s188
      %p200 = scmp.eq.s32.totalorder %s27, 1
      %p201 = por %p199, %p200
      %p203 = scmp.ne.s32.totalorder %s188, %s202
      %p204 = scmp.eq.s32.totalorder %s27, 0
      %p205 = por %p203, %p204
      %s207 = sadd.s32 %s206, 1
      %p210 = scmp.eq.s32.totalorder %s21, 1
      %p211 = scmp.ne.s32.totalorder %s206, %s208
      %p212 = scmp.eq.s32.totalorder %s21, 0
      %p213 = por %p211, %p212
      %p214 = scmp.ne.s32.totalorder %s206, %s208
      %p215 = scmp.eq.s32.totalorder %s26, 1
      %p216 = por %p214, %p215
      %p217 = scmp.ne.s32.totalorder %s208, %s209
      %p218 = scmp.eq.s32.totalorder %s26, 0
      %p219 = por %p217, %p218
      %p220 = scmp.ne.s32.totalorder %s208, %s209
      %p221 = scmp.eq.s32.totalorder %s27, 1
      %p222 = por %p220, %p221
      %p224 = scmp.ne.s32.totalorder %s209, %s223
      %p225 = scmp.eq.s32.totalorder %s27, 0
      %p226 = por %p224, %p225
      %s228 = sadd.s32 %s227, 1
      %p231 = scmp.eq.s32.totalorder %s21, 1
      %p232 = scmp.ne.s32.totalorder %s227, %s229
      %p233 = scmp.eq.s32.totalorder %s21, 0
      %p234 = por %p232, %p233
      %p235 = scmp.ne.s32.totalorder %s227, %s229
      %p236 = scmp.eq.s32.totalorder %s26, 1
      %p237 = por %p235, %p236
      %p238 = scmp.ne.s32.totalorder %s229, %s230
      %p239 = scmp.eq.s32.totalorder %s26, 0
      %p240 = por %p238, %p239
      %p241 = scmp.ne.s32.totalorder %s229, %s230
      %p242 = scmp.eq.s32.totalorder %s27, 1
      %p243 = por %p241, %p242
      %p245 = scmp.ne.s32.totalorder %s230, %s244
      %p246 = scmp.eq.s32.totalorder %s27, 0
      %p247 = por %p245, %p246
      %s249 = sadd.s32 %s248, 1
      %p252 = scmp.eq.s32.totalorder %s21, 1
      %p253 = scmp.ne.s32.totalorder %s248, %s250
      %p254 = scmp.eq.s32.totalorder %s21, 0
      %p255 = por %p253, %p254
      %p256 = scmp.ne.s32.totalorder %s248, %s250
      %p257 = scmp.eq.s32.totalorder %s26, 1
      %p258 = por %p256, %p257
      %p259 = scmp.ne.s32.totalorder %s250, %s251
      %p260 = scmp.eq.s32.totalorder %s26, 0
      %p261 = por %p259, %p260
      %p262 = scmp.ne.s32.totalorder %s250, %s251
      %p263 = scmp.eq.s32.totalorder %s27, 1
      %p264 = por %p262, %p263
      %p266 = scmp.ne.s32.totalorder %s251, %s265
      %p267 = scmp.eq.s32.totalorder %s27, 0
      %p268 = por %p266, %p267
      %s270 = sadd.s32 %s269, 1
      %p273 = scmp.eq.s32.totalorder %s21, 1
      %p274 = scmp.ne.s32.totalorder %s269, %s271
      %p275 = scmp.eq.s32.totalorder %s21, 0
      %p276 = por %p274, %p275
      %p277 = scmp.ne.s32.totalorder %s269, %s271
      %p278 = scmp.eq.s32.totalorder %s26, 1
      %p279 = por %p277, %p278
      %p280 = scmp.ne.s32.totalorder %s271, %s272
      %p281 = scmp.eq.s32.totalorder %s26, 0
      %p282 = por %p280, %p281
      %p283 = scmp.ne.s32.totalorder %s271, %s272
      %p284 = scmp.eq.s32.totalorder %s27, 1
      %p285 = por %p283, %p284
      %p287 = scmp.ne.s32.totalorder %s272, %s286
      %p288 = scmp.eq.s32.totalorder %s27, 0
      %p289 = por %p287, %p288
      %s291 = sadd.s32 %s290, 1
      %p294 = scmp.eq.s32.totalorder %s21, 1
      %p295 = scmp.ne.s32.totalorder %s290, %s292
      %p296 = scmp.eq.s32.totalorder %s21, 0
      %p297 = por %p295, %p296
      %p298 = scmp.ne.s32.totalorder %s290, %s292
      %p299 = scmp.eq.s32.totalorder %s26, 1
      %p300 = por %p298, %p299
      %p301 = scmp.ne.s32.totalorder %s292, %s293
      %p302 = scmp.eq.s32.totalorder %s26, 0
      %p303 = por %p301, %p302
      %p304 = scmp.ne.s32.totalorder %s292, %s293
      %p305 = scmp.eq.s32.totalorder %s27, 1
      %p306 = por %p304, %p305
      %p308 = scmp.ne.s32.totalorder %s293, %s307
      %p309 = scmp.eq.s32.totalorder %s27, 0
      %p310 = por %p308, %p309
      %p311 = scmp.le.s32.totalorder 1, %s21
      %p312 = scmp.lt.s32.totalorder %s21, 3
      %p313 = pnand %p311, %p312
      %p314 = pneg %p313
      // Predicated region
      $region9: #{_lambda_.1} parent=5 // pred_check
        _
      $region10: #{_lambda_.1} parent=5 // pred_check_branch
        %316 = sbr.rel (%p313) target = $region12
      $region11: #{_lambda_.1} parent=5 // pred_region
        %s317 = ssub.s32 %s21, 1
        // Predicated region
        $region13: #{_lambda_.1} parent=11 // pred_check
          %p318 = pneg %p198
        $region14: #{_lambda_.1} parent=11 // pred_check_branch
          %320 = sbr.rel (%p318) target = $region16
        $region15: #{_lambda_.1} parent=11 // pred_region
          _
        $region16: #{_lambda_.1} parent=11 // pred_fallthru
          _
        // Predicated region
        $region17: #{_lambda_.1} parent=11 // pred_check
          %p321 = pneg %p219
        $region18: #{_lambda_.1} parent=11 // pred_check_branch
          %323 = sbr.rel (%p321) target = $region20
        $region19: #{_lambda_.1} parent=11 // pred_region
          _
        $region20: #{_lambda_.1} parent=11 // pred_fallthru
          _
        // Predicated region
        $region21: #{_lambda_.1} parent=11 // pred_check
          %p324 = pneg %p240
        $region22: #{_lambda_.1} parent=11 // pred_check_branch
          %326 = sbr.rel (%p324) target = $region24
        $region23: #{_lambda_.1} parent=11 // pred_region
          _
        $region24: #{_lambda_.1} parent=11 // pred_fallthru
          _
        // Predicated region
        $region25: #{_lambda_.1} parent=11 // pred_check
          %p327 = pneg %p261
        $region26: #{_lambda_.1} parent=11 // pred_check_branch
          %329 = sbr.rel (%p327) target = $region28
        $region27: #{_lambda_.1} parent=11 // pred_region
          _
        $region28: #{_lambda_.1} parent=11 // pred_fallthru
          _
        // Predicated region
        $region29: #{_lambda_.1} parent=11 // pred_check
          %p330 = pneg %p282
        $region30: #{_lambda_.1} parent=11 // pred_check_branch
          %332 = sbr.rel (%p330) target = $region32
        $region31: #{_lambda_.1} parent=11 // pred_region
          _
        $region32: #{_lambda_.1} parent=11 // pred_fallthru
          _
      $region12: #{_lambda_.1} parent=5 // pred_fallthru
        _
      %p333 = scmp.lt.s32.totalorder %s21, 2
      // Predicated region
      $region33: #{_lambda_.1} parent=5 // pred_check
        %p334 = pneg %p333
      $region34: #{_lambda_.1} parent=5 // pred_check_branch
        %336 = sbr.rel (%p334) target = $region36
      $region35: #{_lambda_.1} parent=5 // pred_region
        // Predicated region
        $region37: #{_lambda_.1} parent=35 // pred_check
          %p337 = pneg %p41
        $region38: #{_lambda_.1} parent=35 // pred_check_branch
          %339 = sbr.rel (%p337) target = $region40
        $region39: #{_lambda_.1} parent=35 // pred_region
          %s340 = sand.u32 %s31, 1
          %s341 = sand.u32 %s31, 1
          %s342 = smul.addr %s341, 16
          %s343 = scalar_lea.vmem [#allocation5], %s342
          %s344 = smul.addr %s21, 8
          %s345 = scalar_lea.vmem %s0, %s344
          // Predicated region
          $region41: #{_lambda_.1} parent=39 // pred_check
            _
          $region42: #{_lambda_.1} parent=39 // pred_check_branch
            %347 = sbr.rel (0) target = $region44
          $region43: #{_lambda_.1} parent=39 // pred_region
            // Predicated region
            $region45: #{_lambda_.1} parent=43 // pred_check
              _
            $region46: #{_lambda_.1} parent=43 // pred_check_branch
              %349 = sbr.rel (0) target = $region48
            $region47: #{_lambda_.1} parent=43 // pred_region
              // Predicated region
              $region60: #{_lambda_.1} parent=47 // pred_check
                _
              $region61: #{_lambda_.1} parent=47 // pred_check_branch
                %367 = sbr.rel (0) target = $region63
              $region62: #{_lambda_.1} parent=47 // pred_region
                loop: start=0, step=1, limit=1
                $region64: #{_lambda_.1} parent=62 // loop_pre_header
                  _
                $region65: #{_lambda_.1} parent=62 // loop_header
                  %s369 = sphi 0, %s373
                  %p370 = scmp.ge.s32.totalorder %s369, 1
                  %s374 = sphi %s345, %s345
                  %s375 = sphi %s343, %s343
                $region66: #{_lambda_.1} parent=62 // loop_header_branch
                  %372 = sbr.rel (%p370) target = $region70
                $region67: #{_lambda_.1} parent=62 // loop_body
                  %v376 = vld [vmem:[%s374] sm:$0xff]
                  %377 = vst [vmem:[%s375] sm:$0xff] %v376
                  %v378 = vld [vmem:[%s374 + $0x10] sm:$0xff]
                  %379 = vst [vmem:[%s375 + $0x8] sm:$0xff] %v378
                $region68: #{_lambda_.1} parent=62 // loop_footer
                  %s373 = sadd.s32 1, %s369
                $region69: #{_lambda_.1} parent=62 // loop_footer_branch
                  %368 = sbr.rel target = $region65
                $region70: #{_lambda_.1} parent=62 // loop_exit
                  _
              $region63: #{_lambda_.1} parent=47 // pred_fallthru
                _
              // Predicated region
              $region71: #{_lambda_.1} parent=47 // pred_check
                _
              $region72: #{_lambda_.1} parent=47 // pred_check_branch
                %381 = sbr.rel target = $region74
              $region73: #{_lambda_.1} parent=47 // pred_region
                _
              $region74: #{_lambda_.1} parent=47 // pred_fallthru
                _
            $region48: #{_lambda_.1} parent=43 // pred_fallthru
              _
            // Predicated region
            $region49: #{_lambda_.1} parent=43 // pred_check
              _
            $region50: #{_lambda_.1} parent=43 // pred_check_branch
              %351 = sbr.rel target = $region52
            $region51: #{_lambda_.1} parent=43 // pred_region
              %s353 = ssub.s32 256, 1
              loop: start=0, step=1, limit=1
              $region53: #{_lambda_.1} parent=51 // loop_pre_header
                _
              $region54: #{_lambda_.1} parent=51 // loop_header
                %s355 = sphi 0, %s359
                %p356 = scmp.ge.s32.totalorder %s355, 1
                %s360 = sphi %s345, %s345
                %s361 = sphi %s343, %s343
              $region55: #{_lambda_.1} parent=51 // loop_header_branch
                %358 = sbr.rel (%p356) target = $region59
              $region56: #{_lambda_.1} parent=51 // loop_body
                %v362 = vld [vmem:[%s360] sm:%s353]
                %363 = vst [vmem:[%s361] sm:%s353] %v362
                %v364 = vld [vmem:[%s360 + $0x10] sm:%s353]
                %365 = vst [vmem:[%s361 + $0x8] sm:%s353] %v364
              $region57: #{_lambda_.1} parent=51 // loop_footer
                %s359 = sadd.s32 1, %s355
              $region58: #{_lambda_.1} parent=51 // loop_footer_branch
                %354 = sbr.rel target = $region54
              $region59: #{_lambda_.1} parent=51 // loop_exit
                _
            $region52: #{_lambda_.1} parent=43 // pred_fallthru
              _
          $region44: #{_lambda_.1} parent=39 // pred_fallthru
            _
          %382 = vnop
        $region40: #{_lambda_.1} parent=35 // pred_fallthru
          _
        // Predicated region
        $region75: #{_lambda_.1} parent=35 // pred_check
          %p383 = pneg %p67
        $region76: #{_lambda_.1} parent=35 // pred_check_branch
          %385 = sbr.rel (%p383) target = $region78
        $region77: #{_lambda_.1} parent=35 // pred_region
          %p386 = scmp.lt.s32.totalorder %s21, 1
          %s387 = scalar_select %p386, %s21, 1
          %s388 = smul.addr %s387, 2
          %s389 = smul.addr %s388, 4
          %s390 = scalar_lea.vmem %s1, %s389
        $region78: #{_lambda_.1} parent=35 // pred_fallthru
          _
        // Predicated region
        $region79: #{_lambda_.1} parent=35 // pred_check
          %p391 = pneg %p93
        $region80: #{_lambda_.1} parent=35 // pred_check_branch
          %393 = sbr.rel (%p391) target = $region82
        $region81: #{_lambda_.1} parent=35 // pred_region
          %p394 = scmp.lt.s32.totalorder %s21, 1
          %s395 = scalar_select %p394, %s21, 1
          %s396 = smul.addr %s395, 12
          %s397 = smul.addr %s396, 4
          %s398 = scalar_lea.vmem %s2, %s397
        $region82: #{_lambda_.1} parent=35 // pred_fallthru
          _
        // Predicated region
        $region83: #{_lambda_.1} parent=35 // pred_check
          %p399 = pneg %p119
        $region84: #{_lambda_.1} parent=35 // pred_check_branch
          %401 = sbr.rel (%p399) target = $region86
        $region85: #{_lambda_.1} parent=35 // pred_region
          %p402 = scmp.lt.s32.totalorder %s21, 1
          %s403 = scalar_select %p402, %s21, 1
          %s404 = smul.addr %s403, 8
          %s405 = scalar_lea.vmem %s3, %s404
        $region86: #{_lambda_.1} parent=35 // pred_fallthru
          _
        // Predicated region
        $region87: #{_lambda_.1} parent=35 // pred_check
          %p406 = pneg %p145
        $region88: #{_lambda_.1} parent=35 // pred_check_branch
          %408 = sbr.rel (%p406) target = $region90
        $region89: #{_lambda_.1} parent=35 // pred_region
          %s409 = sand.u32 %s135, 1
          %s410 = scalar_lea.sflag [#allocation7], %s409
          %s411 = sand.u32 %s135, 1
          %s412 = smul.addr %s411, 224
          %s413 = scalar_lea.vmem [#allocation6], %s412
          %415 = vsyncadd %s410, 0
          %s416 = smul.addr %s21, 56
          %s417 = smul.addr %s416, 4
          %s418 = scalar_lea.hbm %s4, %s417
          %s419 = sshll.u32 %s418, 4
          %s420 = int_to_ptr.hbm [resolvable:$true] %s419
          %s421 = sshll.u32 %s413, 4
          %s422 = int_to_ptr.vmem [resolvable:$true] %s421
          %427 = dma.hbm_to_vmem [thread:$0]  %s420, 3584, %s422, %s410, 64, 64, 4
        $region90: #{_lambda_.1} parent=35 // pred_fallthru
          _
        // Predicated region
        $region91: #{_lambda_.1} parent=35 // pred_check
          %p428 = pneg %p171
        $region92: #{_lambda_.1} parent=35 // pred_check_branch
          %430 = sbr.rel (%p428) target = $region94
        $region93: #{_lambda_.1} parent=35 // pred_region
          %p431 = scmp.lt.s32.totalorder %s21, 1
          %s432 = scalar_select %p431, %s21, 1
          %s433 = smul.addr %s432, 4
          %s434 = smul.addr %s433, 4
          %s435 = scalar_lea.vmem %s5, %s434
        $region94: #{_lambda_.1} parent=35 // pred_fallthru
          _
      $region36: #{_lambda_.1} parent=5 // pred_fallthru
        _
      %p436 = scmp.le.s32.totalorder 1, %s21
      %p437 = scmp.lt.s32.totalorder %s21, 3
      %p438 = pnand %p436, %p437
      %p439 = pneg %p438
      // Predicated region
      $region95: #{_lambda_.1} parent=5 // pred_check
        _
      $region96: #{_lambda_.1} parent=5 // pred_check_branch
        %441 = sbr.rel (%p438) target = $region98
      $region97: #{_lambda_.1} parent=5 // pred_region
        %s442 = ssub.s32 %s21, 1
        %s443 = sand.u32 %s34, 1
        %s444 = sand.u32 %s34, 1
        %s445 = smul.addr %s444, 16
        %s446 = scalar_lea.vmem [#allocation5], %s445
        // Predicated region
        $region99: #{_lambda_.1} parent=97 // pred_check
          %p447 = pneg %p47
        $region100: #{_lambda_.1} parent=97 // pred_check_branch
          %449 = sbr.rel (%p447) target = $region102
        $region101: #{_lambda_.1} parent=97 // pred_region
          _
        $region102: #{_lambda_.1} parent=97 // pred_fallthru
          _
        %s450 = sand.u32 %s138, 1
        %s451 = scalar_lea.sflag [#allocation7], %s450
        %s452 = sand.u32 %s138, 1
        %s453 = smul.addr %s452, 224
        %s454 = scalar_lea.vmem [#allocation6], %s453
        // Predicated region
        $region103: #{_lambda_.1} parent=97 // pred_check
          %p455 = pneg %p151
        $region104: #{_lambda_.1} parent=97 // pred_check_branch
          %457 = sbr.rel (%p455) target = $region106
        $region105: #{_lambda_.1} parent=97 // pred_region
          %459 = dma.done %s451, 3584
        $region106: #{_lambda_.1} parent=97 // pred_fallthru
          _
        %s460 = sand.u32 %s34, 1
        %s461 = sand.u32 %s34, 1
        %s462 = smul.addr %s461, 16
        %s463 = scalar_lea.vmem [#allocation5], %s462
        %p464 = pneg %p47
        %p465 = pneg %p44
        %p466 = scmp.lt.s32.totalorder %s26, 1
        %s467 = scalar_select %p466, %s26, 1
        %s468 = smul.addr %s467, 2
        %s469 = smul.addr %s468, 4
        %s470 = scalar_lea.vmem %s1, %s469
        %p471 = pneg %p73
        %p472 = pneg %p70
        %p473 = scmp.lt.s32.totalorder %s26, 1
        %s474 = scalar_select %p473, %s26, 1
        %s475 = smul.addr %s474, 12
        %s476 = smul.addr %s475, 4
        %s477 = scalar_lea.vmem %s2, %s476
        %p478 = pneg %p99
        %p479 = pneg %p96
        %p480 = scmp.lt.s32.totalorder %s26, 1
        %s481 = scalar_select %p480, %s26, 1
        %s482 = smul.addr %s481, 8
        %s483 = scalar_lea.vmem %s3, %s482
        %p484 = pneg %p125
        %p485 = pneg %p122
        %s486 = sand.u32 %s138, 1
        %s487 = scalar_lea.sflag [#allocation7], %s486
        %s488 = sand.u32 %s138, 1
        %s489 = smul.addr %s488, 224
        %s490 = scalar_lea.vmem [#allocation6], %s489
        %p491 = pneg %p151
        %p492 = pneg %p148
        %p493 = scmp.lt.s32.totalorder %s26, 1
        %s494 = scalar_select %p493, %s26, 1
        %s495 = smul.addr %s494, 4
        %s496 = smul.addr %s495, 4
        %s497 = scalar_lea.vmem %s5, %s496
        %p498 = pneg %p177
        %p499 = pneg %p174
        %p500 = pneg %p198
        %p501 = pneg %p195
        %p502 = pneg %p219
        %p503 = pneg %p216
        %p504 = pneg %p240
        %p505 = pneg %p237
        %p506 = pneg %p261
        %p507 = pneg %p258
        %p508 = pneg %p282
        %p509 = pneg %p279
        %p510 = pneg %p303
        %p511 = pneg %p300
        %p512 = scmp.lt.s32.totalorder %s26, 1
        %s513 = scalar_select %p512, %s26, 1
        %s514 = smul.addr %s513, 2
        %s515 = smul.addr %s514, 4
        %s516 = scalar_lea.vmem %s1, %s515
        %p517 = scmp.lt.s32.totalorder %s26, 1
        %s518 = scalar_select %p517, %s26, 1
        %s519 = smul.addr %s518, 12
        %s520 = smul.addr %s519, 4
        %s521 = scalar_lea.vmem %s2, %s520
        %p522 = scmp.lt.s32.totalorder %s26, 1
        %s523 = scalar_select %p522, %s26, 1
        %s524 = smul.addr %s523, 8
        %s525 = scalar_lea.vmem %s3, %s524
        %p526 = scmp.lt.s32.totalorder %s26, 1
        %s527 = scalar_select %p526, %s26, 1
        %s528 = smul.addr %s527, 4
        %s529 = smul.addr %s528, 4
        %s530 = scalar_lea.vmem %s5, %s529
        %p532 = scmp.eq.s32.totalorder %s26, 0
        // Predicated region
        $region107: #{_lambda_.1} parent=97 // pred_check
          %p533 = pneg %p532
        $region108: #{_lambda_.1} parent=97 // pred_check_branch
          %535 = sbr.rel (%p533) target = $region110
        $region109: #{_lambda_.1} parent=97 // pred_region
          %vm536 = vcmask 31744
          %537 = vst.msk [vmem:[#allocation2] sm:$0xff] %vm536, 0.0
          %538 = vst.msk [vmem:[#allocation2 + $0x18] sm:$0xff] %vm536, 0.0
          %vm539 = vcmask 25600
          %540 = vst.msk [vmem:[#allocation2 + $0x10] sm:$0x3] %vm539, 0.0
          %541 = vst.msk [vmem:[#allocation2 + $0x28] sm:$0x3] %vm539, 0.0
          %vm542 = vcmask 261120
          %543 = vst.msk [vmem:[#allocation3] sm:$0xff] %vm542, 0.0
          %544 = vst.msk [vmem:[#allocation3 + $0x18] sm:$0xff] %vm542, 0.0
          %vm545 = vcmask 257024
          %546 = vst.msk [vmem:[#allocation3 + $0x12] sm:$0xf] %vm545, 0.0
          %547 = vst.msk [vmem:[#allocation3 + $0x2a] sm:$0xf] %vm545, 0.0
          %548 = vst [vmem:[#allocation4] sm:$0x3] 0.0
        $region110: #{_lambda_.1} parent=97 // pred_fallthru
          _
        %v549 = vld [vmem:[%s446] sm:$0xff]
        %v550 = vld [vmem:[%s446 + $0x8] sm:$0xff]
        %vm551 = vcmask 31744
        %552 = vst.msk [vmem:[#allocation2 + $0x8] sm:$0xff] %vm551, %v549
        %553 = vst.msk [vmem:[#allocation2 + $0x20] sm:$0xff] %vm551, %v550
        %v554 = vld [vmem:[#allocation2 + $0x6] sm:$0xff]
        %v555 = vld [vmem:[#allocation2 + $0xe] sm:$0x3]
        %v556 = vld [vmem:[#allocation2 + $0x1e] sm:$0xff]
        %v557 = vld [vmem:[#allocation2 + $0x26] sm:$0x3]
        %v558 = vld [vmem:[%s516] sm:$0x3]
        %v559 = vpack.c.bf16 %v554, %v554
        %v560 = vpack.c.bf16 %v555, %v555
        %v561 = vpack.c.bf16 %v556, %v556
        %v562 = vpack.c.bf16 %v557, %v557
        %v563 = vld [vmem:[#allocation2 + $0x7] sm:$0xff]
        %v564 = vld [vmem:[#allocation2 + $0xf] sm:$0x3]
        %v565 = vld [vmem:[#allocation2 + $0x1f] sm:$0xff]
        %v566 = vld [vmem:[#allocation2 + $0x27] sm:$0x3]
        %v567 = vld [vmem:[%s516] sm:$0xc]
        %v568 = vpack.c.bf16 %v563, %v563
        %v569 = vpack.c.bf16 %v564, %v564
        %v570 = vpack.c.bf16 %v565, %v565
        %v571 = vpack.c.bf16 %v566, %v566
        %v574 = vunpack.c.l.b16 %v568
        %v575 = vunpack.c.l.b16 %v569
        %v576 = vpack.c.b16 %v575, %v574
        %v578 = vunpack.c.l.b16 %v567
        %v579 = vpack.c.b16 %v578, %v578
        %v580 = vrot.slane %v579, 2
        %v582 = vsel %vm551, %v576, 0
        %vm584 = vcmask 1041408
        %v586 = vsel %vm584, %v580, 0
        %588 = vmatpush.bf16.msra.mxu0 0
        %589 = vmatpush.bf16.msra.mxu0 0
        %590 = vmatpush.bf16.msra.mxu0 0
        %591 = vmatpush.bf16.msra.mxu0 0
        %592 = vmatpush.bf16.msra.mxu0 0
        %593 = vmatpush.bf16.msra.mxu0 0
        %594 = vmatpush.bf16.msra.mxu0 0
        %595 = vmatpush.bf16.msra.mxu0 %v586
        %596 = vmatmul.bf16.gmra.mxu0 %v582
        %v597 = vpop.f32.mrf.mxu0
        %v598 = vadd.f32 0.0, %v597
        %v599 = vpop.f32.mrf.mxu0
        %v600 = vadd.f32 0.0, %v599
        %601 = vdwg.mxu0
        %v604 = vunpack.c.l.b16 %v570
        %v605 = vunpack.c.l.b16 %v571
        %v606 = vpack.c.b16 %v605, %v604
        %v608 = vsel %vm551, %v606, 0
        %610 = vmatpush.bf16.msra.mxu0 0
        %611 = vmatpush.bf16.msra.mxu0 0
        %612 = vmatpush.bf16.msra.mxu0 0
        %613 = vmatpush.bf16.msra.mxu0 0
        %614 = vmatpush.bf16.msra.mxu0 0
        %615 = vmatpush.bf16.msra.mxu0 0
        %616 = vmatpush.bf16.msra.mxu0 0
        %617 = vmatpush.bf16.msra.mxu0 %v586
        %618 = vmatmul.bf16.gmra.mxu0 %v608
        %v619 = vpop.f32.mrf.mxu0
        %v620 = vadd.f32 0.0, %v619
        %v621 = vpop.f32.mrf.mxu0
        %v622 = vadd.f32 0.0, %v621
        %623 = vdwg.mxu0
        %v626 = vunpack.c.l.b16 %v559
        %v627 = vunpack.c.l.b16 %v560
        %v628 = vpack.c.b16 %v627, %v626
        %v630 = vsel %vm551, %v628, 0
        %v633 = vsel %vm584, %v558, 0
        %635 = vmatpush.bf16.msra.mxu0 0
        %636 = vmatpush.bf16.msra.mxu0 0
        %637 = vmatpush.bf16.msra.mxu0 0
        %638 = vmatpush.bf16.msra.mxu0 0
        %639 = vmatpush.bf16.msra.mxu0 0
        %640 = vmatpush.bf16.msra.mxu0 0
        %641 = vmatpush.bf16.msra.mxu0 0
        %642 = vmatpush.bf16.msra.mxu0 %v633
        %643 = vmatmul.bf16.gmra.mxu0 %v630
        %v644 = vpop.f32.mrf.mxu0
        %v645 = vadd.f32 %v598, %v644
        %v646 = vpop.f32.mrf.mxu0
        %v647 = vadd.f32 %v600, %v646
        %648 = vdwg.mxu0
        %v651 = vunpack.c.l.b16 %v561
        %v652 = vunpack.c.l.b16 %v562
        %v653 = vpack.c.b16 %v652, %v651
        %v655 = vsel %vm551, %v653, 0
        %657 = vmatpush.bf16.msra.mxu0 0
        %658 = vmatpush.bf16.msra.mxu0 0
        %659 = vmatpush.bf16.msra.mxu0 0
        %660 = vmatpush.bf16.msra.mxu0 0
        %661 = vmatpush.bf16.msra.mxu0 0
        %662 = vmatpush.bf16.msra.mxu0 0
        %663 = vmatpush.bf16.msra.mxu0 0
        %664 = vmatpush.bf16.msra.mxu0 %v633
        %665 = vmatmul.bf16.gmra.mxu0 %v655
        %v666 = vpop.f32.mrf.mxu0
        %v667 = vadd.f32 %v620, %v666
        %v668 = vpop.f32.mrf.mxu0
        %v669 = vadd.f32 %v622, %v668
        %670 = vdwg.mxu0
        %v671 = vld [vmem:[#allocation2 + $0x8] sm:$0xff]
        %v672 = vld [vmem:[#allocation2 + $0x10] sm:$0x3]
        %v673 = vld [vmem:[#allocation2 + $0x20] sm:$0xff]
        %v674 = vld [vmem:[#allocation2 + $0x28] sm:$0x3]
        %v675 = vld [vmem:[%s516 + $0x4] sm:$0x3]
        %v676 = vpack.c.bf16 %v671, %v671
        %v677 = vpack.c.bf16 %v672, %v672
        %v678 = vpack.c.bf16 %v673, %v673
        %v679 = vpack.c.bf16 %v674, %v674
        %v682 = vunpack.c.l.b16 %v676
        %v683 = vunpack.c.l.b16 %v677
        %v684 = vpack.c.b16 %v683, %v682
        %v686 = vsel %vm551, %v684, 0
        %v689 = vsel %vm584, %v675, 0
        %691 = vmatpush.bf16.msra.mxu0 0
        %692 = vmatpush.bf16.msra.mxu0 0
        %693 = vmatpush.bf16.msra.mxu0 0
        %694 = vmatpush.bf16.msra.mxu0 0
        %695 = vmatpush.bf16.msra.mxu0 0
        %696 = vmatpush.bf16.msra.mxu0 0
        %697 = vmatpush.bf16.msra.mxu0 0
        %698 = vmatpush.bf16.msra.mxu0 %v689
        %699 = vmatmul.bf16.gmra.mxu0 %v686
        %v700 = vpop.f32.mrf.mxu0
        %v701 = vadd.f32 0.0, %v700
        %v702 = vpop.f32.mrf.mxu0
        %v703 = vadd.f32 0.0, %v702
        %704 = vdwg.mxu0
        %v707 = vunpack.c.l.b16 %v678
        %v708 = vunpack.c.l.b16 %v679
        %v709 = vpack.c.b16 %v708, %v707
        %v711 = vsel %vm551, %v709, 0
        %713 = vmatpush.bf16.msra.mxu0 0
        %714 = vmatpush.bf16.msra.mxu0 0
        %715 = vmatpush.bf16.msra.mxu0 0
        %716 = vmatpush.bf16.msra.mxu0 0
        %717 = vmatpush.bf16.msra.mxu0 0
        %718 = vmatpush.bf16.msra.mxu0 0
        %719 = vmatpush.bf16.msra.mxu0 0
        %720 = vmatpush.bf16.msra.mxu0 %v689
        %721 = vmatmul.bf16.gmra.mxu0 %v711
        %v722 = vpop.f32.mrf.mxu0
        %v723 = vadd.f32 0.0, %v722
        %v724 = vpop.f32.mrf.mxu0
        %v725 = vadd.f32 0.0, %v724
        %726 = vdwg.mxu0
        %v727 = vadd.f32 %v645, %v701
        %v728 = vadd.f32 %v647, %v703
        %v729 = vadd.f32 %v667, %v723
        %v730 = vadd.f32 %v669, %v725
        %v731 = vld [vmem:[%s525] sm:$0x1]
        %v732 = vld [vmem:[%s525 + $0x1] sm:$0x1]
        %v733 = vld [vmem:[%s525 + $0x2] sm:$0x1]
        %v734 = vperm.slane %v731, 0
        %v735 = vadd.f32 %v727, %v734
        %v736 = vadd.f32 %v728, %v734
        %v737 = vadd.f32 %v729, %v734
        %v738 = vadd.f32 %v730, %v734
        %v739 = vmax.f32 %v735, 0.0
        %v740 = vmax.f32 %v736, 0.0
        %v741 = vmax.f32 %v737, 0.0
        %v742 = vmax.f32 %v738, 0.0
        %v743 = vperm.slane %v732, 0
        %v744 = vmul.f32 %v739, %v743
        %v745 = vmul.f32 %v740, %v743
        %v746 = vmul.f32 %v741, %v743
        %v747 = vmul.f32 %v742, %v743
        %v748 = vperm.slane %v733, 0
        %v749 = vadd.f32 %v744, %v748
        %v750 = vadd.f32 %v745, %v748
        %v751 = vadd.f32 %v746, %v748
        %v752 = vadd.f32 %v747, %v748
        %vm753 = vcmask 261120
        %754 = vst.msk [vmem:[#allocation3 + $0x8] sm:$0xff] %vm753, %v749
        %vm755 = vcmask 254976
        %756 = vst.msk [vmem:[#allocation3 + $0x10] sm:$0x3] %vm755, %v750
        %757 = vst.msk [vmem:[#allocation3 + $0x20] sm:$0xff] %vm753, %v751
        %758 = vst.msk [vmem:[#allocation3 + $0x28] sm:$0x3] %vm755, %v752
        %v759 = vld [vmem:[#allocation3 + $0x4] sm:$0xff]
        %v760 = vld [vmem:[#allocation3 + $0xc] sm:$0x3f]
        %v761 = vld [vmem:[#allocation3 + $0x1c] sm:$0xff]
        %v762 = vld [vmem:[#allocation3 + $0x24] sm:$0x3f]
        %v763 = vld [vmem:[%s521] sm:$0xf]
        %v764 = vld [vmem:[%s521 + $0x4] sm:$0xf]
        %v765 = vld [vmem:[%s521 + $0x8] sm:$0xf]
        %v766 = vld [vmem:[%s521 + $0xc] sm:$0xf]
        %v767 = vpack.c.bf16 %v759, %v759
        %v768 = vpack.c.bf16 %v760, %v760
        %v769 = vpack.c.bf16 %v761, %v761
        %v770 = vpack.c.bf16 %v762, %v762
        %v771 = vld [vmem:[#allocation3 + $0x6] sm:$0xff]
        %v772 = vld [vmem:[#allocation3 + $0xe] sm:$0x3f]
        %v773 = vld [vmem:[#allocation3 + $0x1e] sm:$0xff]
        %v774 = vld [vmem:[#allocation3 + $0x26] sm:$0x3f]
        %v775 = vld [vmem:[%s521 + $0x10] sm:$0xf]
        %v776 = vld [vmem:[%s521 + $0x14] sm:$0xf]
        %v777 = vld [vmem:[%s521 + $0x18] sm:$0xf]
        %v778 = vld [vmem:[%s521 + $0x1c] sm:$0xf]
        %v779 = vpack.c.bf16 %v771, %v771
        %v780 = vpack.c.bf16 %v772, %v772
        %v781 = vpack.c.bf16 %v773, %v773
        %v782 = vpack.c.bf16 %v774, %v774
        %v785 = vunpack.c.l.b16 %v779
        %v786 = vunpack.c.l.b16 %v780
        %v787 = vpack.c.b16 %v786, %v785
        %v792 = vunpack.c.l.b16 %v775
        %v793 = vunpack.c.l.b16 %v776
        %v794 = vunpack.c.l.b16 %v777
        %v795 = vunpack.c.l.b16 %v778
        %v796 = vpack.c.b16 %v793, %v792
        %v797 = vpack.c.b16 %v795, %v794
        %v801 = vsel %vm753, %v787, 0
        %803 = vmatpush.bf16.msra.mxu0 0
        %804 = vmatpush.bf16.msra.mxu0 0
        %805 = vmatpush.bf16.msra.mxu0 0
        %806 = vmatpush.bf16.msra.mxu0 0
        %807 = vmatpush.bf16.msra.mxu0 0
        %808 = vmatpush.bf16.msra.mxu0 0
        %809 = vmatpush.bf16.msra.mxu0 %v797
        %810 = vmatpush.bf16.msra.mxu0 %v796
        %811 = vmatmul.bf16.gmra.mxu0 %v801
        %v812 = vpop.f32.mrf.mxu0
        %v813 = vadd.f32 0.0, %v812
        %v814 = vpop.f32.mrf.mxu0
        %v815 = vadd.f32 0.0, %v814
        %816 = vdwg.mxu0
        %v819 = vunpack.c.l.b16 %v781
        %v820 = vunpack.c.l.b16 %v782
        %v821 = vpack.c.b16 %v820, %v819
        %v823 = vsel %vm753, %v821, 0
        %825 = vmatpush.bf16.msra.mxu0 0
        %826 = vmatpush.bf16.msra.mxu0 0
        %827 = vmatpush.bf16.msra.mxu0 0
        %828 = vmatpush.bf16.msra.mxu0 0
        %829 = vmatpush.bf16.msra.mxu0 0
        %830 = vmatpush.bf16.msra.mxu0 0
        %831 = vmatpush.bf16.msra.mxu0 %v797
        %832 = vmatpush.bf16.msra.mxu0 %v796
        %833 = vmatmul.bf16.gmra.mxu0 %v823
        %v834 = vpop.f32.mrf.mxu0
        %v835 = vadd.f32 0.0, %v834
        %v836 = vpop.f32.mrf.mxu0
        %v837 = vadd.f32 0.0, %v836
        %838 = vdwg.mxu0
        %v841 = vunpack.c.l.b16 %v767
        %v842 = vunpack.c.l.b16 %v768
        %v843 = vpack.c.b16 %v842, %v841
        %v848 = vunpack.c.l.b16 %v763
        %v849 = vunpack.c.l.b16 %v764
        %v850 = vunpack.c.l.b16 %v765
        %v851 = vunpack.c.l.b16 %v766
        %v852 = vpack.c.b16 %v849, %v848
        %v853 = vpack.c.b16 %v851, %v850
        %v857 = vsel %vm753, %v843, 0
        %859 = vmatpush.bf16.msra.mxu0 0
        %860 = vmatpush.bf16.msra.mxu0 0
        %861 = vmatpush.bf16.msra.mxu0 0
        %862 = vmatpush.bf16.msra.mxu0 0
        %863 = vmatpush.bf16.msra.mxu0 0
        %864 = vmatpush.bf16.msra.mxu0 0
        %865 = vmatpush.bf16.msra.mxu0 %v853
        %866 = vmatpush.bf16.msra.mxu0 %v852
        %867 = vmatmul.bf16.gmra.mxu0 %v857
        %v868 = vpop.f32.mrf.mxu0
        %v869 = vadd.f32 %v813, %v868
        %v870 = vpop.f32.mrf.mxu0
        %v871 = vadd.f32 %v815, %v870
        %872 = vdwg.mxu0
        %v875 = vunpack.c.l.b16 %v769
        %v876 = vunpack.c.l.b16 %v770
        %v877 = vpack.c.b16 %v876, %v875
        %v879 = vsel %vm753, %v877, 0
        %881 = vmatpush.bf16.msra.mxu0 0
        %882 = vmatpush.bf16.msra.mxu0 0
        %883 = vmatpush.bf16.msra.mxu0 0
        %884 = vmatpush.bf16.msra.mxu0 0
        %885 = vmatpush.bf16.msra.mxu0 0
        %886 = vmatpush.bf16.msra.mxu0 0
        %887 = vmatpush.bf16.msra.mxu0 %v853
        %888 = vmatpush.bf16.msra.mxu0 %v852
        %889 = vmatmul.bf16.gmra.mxu0 %v879
        %v890 = vpop.f32.mrf.mxu0
        %v891 = vadd.f32 %v835, %v890
        %v892 = vpop.f32.mrf.mxu0
        %v893 = vadd.f32 %v837, %v892
        %894 = vdwg.mxu0
        %v895 = vld [vmem:[#allocation3 + $0x8] sm:$0xff]
        %v896 = vld [vmem:[#allocation3 + $0x10] sm:$0x3f]
        %v897 = vld [vmem:[#allocation3 + $0x20] sm:$0xff]
        %v898 = vld [vmem:[#allocation3 + $0x28] sm:$0x3f]
        %v899 = vld [vmem:[%s521 + $0x20] sm:$0xf]
        %v900 = vld [vmem:[%s521 + $0x24] sm:$0xf]
        %v901 = vld [vmem:[%s521 + $0x28] sm:$0xf]
        %v902 = vld [vmem:[%s521 + $0x2c] sm:$0xf]
        %v903 = vpack.c.bf16 %v895, %v895
        %v904 = vpack.c.bf16 %v896, %v896
        %v905 = vpack.c.bf16 %v897, %v897
        %v906 = vpack.c.bf16 %v898, %v898
        %v909 = vunpack.c.l.b16 %v903
        %v910 = vunpack.c.l.b16 %v904
        %v911 = vpack.c.b16 %v910, %v909
        %v916 = vunpack.c.l.b16 %v899
        %v917 = vunpack.c.l.b16 %v900
        %v918 = vunpack.c.l.b16 %v901
        %v919 = vunpack.c.l.b16 %v902
        %v920 = vpack.c.b16 %v917, %v916
        %v921 = vpack.c.b16 %v919, %v918
        %v925 = vsel %vm753, %v911, 0
        %927 = vmatpush.bf16.msra.mxu0 0
        %928 = vmatpush.bf16.msra.mxu0 0
        %929 = vmatpush.bf16.msra.mxu0 0
        %930 = vmatpush.bf16.msra.mxu0 0
        %931 = vmatpush.bf16.msra.mxu0 0
        %932 = vmatpush.bf16.msra.mxu0 0
        %933 = vmatpush.bf16.msra.mxu0 %v921
        %934 = vmatpush.bf16.msra.mxu0 %v920
        %935 = vmatmul.bf16.gmra.mxu0 %v925
        %v936 = vpop.f32.mrf.mxu0
        %v937 = vadd.f32 0.0, %v936
        %v938 = vpop.f32.mrf.mxu0
        %v939 = vadd.f32 0.0, %v938
        %940 = vdwg.mxu0
        %v943 = vunpack.c.l.b16 %v905
        %v944 = vunpack.c.l.b16 %v906
        %v945 = vpack.c.b16 %v944, %v943
        %v947 = vsel %vm753, %v945, 0
        %949 = vmatpush.bf16.msra.mxu0 0
        %950 = vmatpush.bf16.msra.mxu0 0
        %951 = vmatpush.bf16.msra.mxu0 0
        %952 = vmatpush.bf16.msra.mxu0 0
        %953 = vmatpush.bf16.msra.mxu0 0
        %954 = vmatpush.bf16.msra.mxu0 0
        %955 = vmatpush.bf16.msra.mxu0 %v921
        %956 = vmatpush.bf16.msra.mxu0 %v920
        %957 = vmatmul.bf16.gmra.mxu0 %v947
        %v958 = vpop.f32.mrf.mxu0
        %v959 = vadd.f32 0.0, %v958
        %v960 = vpop.f32.mrf.mxu0
        %v961 = vadd.f32 0.0, %v960
        %962 = vdwg.mxu0
        %v963 = vadd.f32 %v869, %v937
        %v964 = vadd.f32 %v871, %v939
        %v965 = vadd.f32 %v891, %v959
        %v966 = vadd.f32 %v893, %v961
        %v967 = vld [vmem:[%s525 + $0x3] sm:$0x1]
        %v968 = vld [vmem:[%s525 + $0x4] sm:$0x1]
        %v969 = vld [vmem:[%s525 + $0x5] sm:$0x1]
        %v970 = vperm.slane %v967, 0
        %v971 = vadd.f32 %v963, %v970
        %v972 = vadd.f32 %v964, %v970
        %v973 = vadd.f32 %v965, %v970
        %v974 = vadd.f32 %v966, %v970
        %v975 = vmax.f32 %v971, 0.0
        %v976 = vmax.f32 %v972, 0.0
        %v977 = vmax.f32 %v973, 0.0
        %v978 = vmax.f32 %v974, 0.0
        %v979 = vperm.slane %v968, 0
        %v980 = vmul.f32 %v975, %v979
        %v981 = vmul.f32 %v976, %v979
        %v982 = vmul.f32 %v977, %v979
        %v983 = vmul.f32 %v978, %v979
        %v984 = vperm.slane %v969, 0
        %v985 = vadd.f32 %v980, %v984
        %v986 = vadd.f32 %v981, %v984
        %v987 = vadd.f32 %v982, %v984
        %v988 = vadd.f32 %v983, %v984
        %v989 = vld [vmem:[%s525 + $0x6] sm:$0x1]
        %v990 = vperm.slane %v989, 0
        %v991 = vpack.c.bf16 %v985, %v985
        %v992 = vpack.c.bf16 %v986, %v986
        %v993 = vpack.c.bf16 %v987, %v987
        %v994 = vpack.c.bf16 %v988, %v988
        %v995 = vld [vmem:[%s454] sm:$0xf]
        %v996 = vld [vmem:[%s454 + $0x4] sm:$0xf]
        %v997 = vld [vmem:[%s454 + $0x8] sm:$0xf]
        %v998 = vld [vmem:[%s454 + $0xc] sm:$0xf]
        %v1001 = vunpack.c.l.b16 %v991
        %v1002 = vunpack.c.l.b16 %v993
        %v1003 = vpack.c.b16 %v1001, %v1001
        %v1004 = vpack.c.b16 %v1002, %v1002
        %v1005 = vunpack.c.l.b16 %v1003
        %v1006 = vunpack.c.l.b16 %v1004
        %v1007 = vrot.slane %v1006, 7
        %vm1008 = vcmask 1041409
        %v1009 = vsel %vm1008, %v1007, %v1005
        %v1010 = vpack.c.b16 %v1009, %v1009
        %v1015 = vunpack.c.l.b16 %v995
        %v1016 = vunpack.c.l.b16 %v996
        %v1017 = vunpack.c.l.b16 %v997
        %v1018 = vunpack.c.l.b16 %v998
        %v1019 = vpack.c.b16 %v1016, %v1015
        %v1020 = vpack.c.b16 %v1018, %v1017
        %v1024 = vsel %vm753, %v1010, 0
        %1026 = vmatpush.bf16.msra.mxu0 0
        %1027 = vmatpush.bf16.msra.mxu0 0
        %1028 = vmatpush.bf16.msra.mxu0 0
        %1029 = vmatpush.bf16.msra.mxu0 0
        %1030 = vmatpush.bf16.msra.mxu0 0
        %1031 = vmatpush.bf16.msra.mxu0 0
        %1032 = vmatpush.bf16.msra.mxu0 %v1020
        %1033 = vmatpush.bf16.msra.mxu0 %v1019
        %1034 = vmatmul.bf16.gmra.mxu0 %v1024
        %v1035 = vpop.f32.mrf.mxu0
        %v1036 = vadd.f32 0.0, %v1035
        %v1037 = vpop.f32.mrf.mxu0
        %1038 = vdwg.mxu0
        %v1039 = vadd.f32 %v990, %v1036
        %s1040 = scalar_lea.vmem %s454, 16 [#allocation6]
        %v1041 = vld [vmem:[%s1040] sm:$0xf]
        %v1042 = vld [vmem:[%s1040 + $0x4] sm:$0xf]
        %v1043 = vld [vmem:[%s1040 + $0x8] sm:$0xf]
        %v1044 = vld [vmem:[%s1040 + $0xc] sm:$0xf]
        %v1045 = vrot.slane %v1005, 1
        %v1046 = vsel %vm1008, %v1006, %v1045
        %v1047 = vpack.c.b16 %v1046, %v1046
        %v1052 = vunpack.c.l.b16 %v1041
        %v1053 = vunpack.c.l.b16 %v1042
        %v1054 = vunpack.c.l.b16 %v1043
        %v1055 = vunpack.c.l.b16 %v1044
        %v1056 = vpack.c.b16 %v1053, %v1052
        %v1057 = vpack.c.b16 %v1055, %v1054
        %v1061 = vsel %vm753, %v1047, 0
        %1063 = vmatpush.bf16.msra.mxu0 0
        %1064 = vmatpush.bf16.msra.mxu0 0
        %1065 = vmatpush.bf16.msra.mxu0 0
        %1066 = vmatpush.bf16.msra.mxu0 0
        %1067 = vmatpush.bf16.msra.mxu0 0
        %1068 = vmatpush.bf16.msra.mxu0 0
        %1069 = vmatpush.bf16.msra.mxu0 %v1057
        %1070 = vmatpush.bf16.msra.mxu0 %v1056
        %1071 = vmatmul.bf16.gmra.mxu0 %v1061
        %v1072 = vpop.f32.mrf.mxu0
        %v1073 = vadd.f32 0.0, %v1072
        %v1074 = vpop.f32.mrf.mxu0
        %1075 = vdwg.mxu0
        %v1076 = vadd.f32 %v1039, %v1073
        %s1077 = scalar_lea.vmem %s454, 32 [#allocation6]
        %v1078 = vld [vmem:[%s1077] sm:$0xf]
        %v1079 = vld [vmem:[%s1077 + $0x4] sm:$0xf]
        %v1080 = vld [vmem:[%s1077 + $0x8] sm:$0xf]
        %v1081 = vld [vmem:[%s1077 + $0xc] sm:$0xf]
        %v1082 = vrot.slane %v1005, 2
        %v1083 = vrot.slane %v1006, 1
        %v1084 = vsel %vm1008, %v1083, %v1082
        %v1085 = vpack.c.b16 %v1084, %v1084
        %v1090 = vunpack.c.l.b16 %v1078
        %v1091 = vunpack.c.l.b16 %v1079
        %v1092 = vunpack.c.l.b16 %v1080
        %v1093 = vunpack.c.l.b16 %v1081
        %v1094 = vpack.c.b16 %v1091, %v1090
        %v1095 = vpack.c.b16 %v1093, %v1092
        %v1099 = vsel %vm753, %v1085, 0
        %1101 = vmatpush.bf16.msra.mxu0 0
        %1102 = vmatpush.bf16.msra.mxu0 0
        %1103 = vmatpush.bf16.msra.mxu0 0
        %1104 = vmatpush.bf16.msra.mxu0 0
        %1105 = vmatpush.bf16.msra.mxu0 0
        %1106 = vmatpush.bf16.msra.mxu0 0
        %1107 = vmatpush.bf16.msra.mxu0 %v1095
        %1108 = vmatpush.bf16.msra.mxu0 %v1094
        %1109 = vmatmul.bf16.gmra.mxu0 %v1099
        %v1110 = vpop.f32.mrf.mxu0
        %v1111 = vadd.f32 0.0, %v1110
        %v1112 = vpop.f32.mrf.mxu0
        %1113 = vdwg.mxu0
        %v1114 = vadd.f32 %v1076, %v1111
        %s1115 = scalar_lea.vmem %s454, 48 [#allocation6]
        %v1116 = vld [vmem:[%s1115] sm:$0xf]
        %v1117 = vld [vmem:[%s1115 + $0x4] sm:$0xf]
        %v1118 = vld [vmem:[%s1115 + $0x8] sm:$0xf]
        %v1119 = vld [vmem:[%s1115 + $0xc] sm:$0xf]
        %v1120 = vrot.slane %v1005, 3
        %v1121 = vrot.slane %v1006, 2
        %v1122 = vsel %vm1008, %v1121, %v1120
        %v1123 = vpack.c.b16 %v1122, %v1122
        %v1128 = vunpack.c.l.b16 %v1116
        %v1129 = vunpack.c.l.b16 %v1117
        %v1130 = vunpack.c.l.b16 %v1118
        %v1131 = vunpack.c.l.b16 %v1119
        %v1132 = vpack.c.b16 %v1129, %v1128
        %v1133 = vpack.c.b16 %v1131, %v1130
        %v1137 = vsel %vm753, %v1123, 0
        %1139 = vmatpush.bf16.msra.mxu0 0
        %1140 = vmatpush.bf16.msra.mxu0 0
        %1141 = vmatpush.bf16.msra.mxu0 0
        %1142 = vmatpush.bf16.msra.mxu0 0
        %1143 = vmatpush.bf16.msra.mxu0 0
        %1144 = vmatpush.bf16.msra.mxu0 0
        %1145 = vmatpush.bf16.msra.mxu0 %v1133
        %1146 = vmatpush.bf16.msra.mxu0 %v1132
        %1147 = vmatmul.bf16.gmra.mxu0 %v1137
        %v1148 = vpop.f32.mrf.mxu0
        %v1149 = vadd.f32 0.0, %v1148
        %v1150 = vpop.f32.mrf.mxu0
        %1151 = vdwg.mxu0
        %v1152 = vadd.f32 %v1114, %v1149
        %s1153 = scalar_lea.vmem %s454, 64 [#allocation6]
        %v1154 = vld [vmem:[%s1153] sm:$0xf]
        %v1155 = vld [vmem:[%s1153 + $0x4] sm:$0xf]
        %v1156 = vld [vmem:[%s1153 + $0x8] sm:$0xf]
        %v1157 = vld [vmem:[%s1153 + $0xc] sm:$0xf]
        %v1158 = vrot.slane %v1005, 4
        %v1159 = vrot.slane %v1006, 3
        %v1160 = vsel %vm1008, %v1159, %v1158
        %v1161 = vpack.c.b16 %v1160, %v1160
        %v1166 = vunpack.c.l.b16 %v1154
        %v1167 = vunpack.c.l.b16 %v1155
        %v1168 = vunpack.c.l.b16 %v1156
        %v1169 = vunpack.c.l.b16 %v1157
        %v1170 = vpack.c.b16 %v1167, %v1166
        %v1171 = vpack.c.b16 %v1169, %v1168
        %v1175 = vsel %vm753, %v1161, 0
        %1177 = vmatpush.bf16.msra.mxu0 0
        %1178 = vmatpush.bf16.msra.mxu0 0
        %1179 = vmatpush.bf16.msra.mxu0 0
        %1180 = vmatpush.bf16.msra.mxu0 0
        %1181 = vmatpush.bf16.msra.mxu0 0
        %1182 = vmatpush.bf16.msra.mxu0 0
        %1183 = vmatpush.bf16.msra.mxu0 %v1171
        %1184 = vmatpush.bf16.msra.mxu0 %v1170
        %1185 = vmatmul.bf16.gmra.mxu0 %v1175
        %v1186 = vpop.f32.mrf.mxu0
        %v1187 = vadd.f32 0.0, %v1186
        %v1188 = vpop.f32.mrf.mxu0
        %1189 = vdwg.mxu0
        %v1190 = vadd.f32 %v1152, %v1187
        %s1191 = scalar_lea.vmem %s454, 80 [#allocation6]
        %v1192 = vld [vmem:[%s1191] sm:$0xf]
        %v1193 = vld [vmem:[%s1191 + $0x4] sm:$0xf]
        %v1194 = vld [vmem:[%s1191 + $0x8] sm:$0xf]
        %v1195 = vld [vmem:[%s1191 + $0xc] sm:$0xf]
        %v1196 = vrot.slane %v1005, 5
        %v1197 = vrot.slane %v1006, 4
        %v1198 = vsel %vm1008, %v1197, %v1196
        %v1199 = vpack.c.b16 %v1198, %v1198
        %v1204 = vunpack.c.l.b16 %v1192
        %v1205 = vunpack.c.l.b16 %v1193
        %v1206 = vunpack.c.l.b16 %v1194
        %v1207 = vunpack.c.l.b16 %v1195
        %v1208 = vpack.c.b16 %v1205, %v1204
        %v1209 = vpack.c.b16 %v1207, %v1206
        %v1213 = vsel %vm753, %v1199, 0
        %1215 = vmatpush.bf16.msra.mxu0 0
        %1216 = vmatpush.bf16.msra.mxu0 0
        %1217 = vmatpush.bf16.msra.mxu0 0
        %1218 = vmatpush.bf16.msra.mxu0 0
        %1219 = vmatpush.bf16.msra.mxu0 0
        %1220 = vmatpush.bf16.msra.mxu0 0
        %1221 = vmatpush.bf16.msra.mxu0 %v1209
        %1222 = vmatpush.bf16.msra.mxu0 %v1208
        %1223 = vmatmul.bf16.gmra.mxu0 %v1213
        %v1224 = vpop.f32.mrf.mxu0
        %v1225 = vadd.f32 0.0, %v1224
        %v1226 = vpop.f32.mrf.mxu0
        %1227 = vdwg.mxu0
        %v1228 = vadd.f32 %v1190, %v1225
        %s1229 = scalar_lea.vmem %s454, 96 [#allocation6]
        %v1230 = vld [vmem:[%s1229] sm:$0xf]
        %v1231 = vld [vmem:[%s1229 + $0x4] sm:$0xf]
        %v1232 = vld [vmem:[%s1229 + $0x8] sm:$0xf]
        %v1233 = vld [vmem:[%s1229 + $0xc] sm:$0xf]
        %v1234 = vrot.slane %v1005, 6
        %v1235 = vrot.slane %v1006, 5
        %v1236 = vsel %vm1008, %v1235, %v1234
        %v1237 = vpack.c.b16 %v1236, %v1236
        %v1242 = vunpack.c.l.b16 %v1230
        %v1243 = vunpack.c.l.b16 %v1231
        %v1244 = vunpack.c.l.b16 %v1232
        %v1245 = vunpack.c.l.b16 %v1233
        %v1246 = vpack.c.b16 %v1243, %v1242
        %v1247 = vpack.c.b16 %v1245, %v1244
        %v1251 = vsel %vm753, %v1237, 0
        %1253 = vmatpush.bf16.msra.mxu0 0
        %1254 = vmatpush.bf16.msra.mxu0 0
        %1255 = vmatpush.bf16.msra.mxu0 0
        %1256 = vmatpush.bf16.msra.mxu0 0
        %1257 = vmatpush.bf16.msra.mxu0 0
        %1258 = vmatpush.bf16.msra.mxu0 0
        %1259 = vmatpush.bf16.msra.mxu0 %v1247
        %1260 = vmatpush.bf16.msra.mxu0 %v1246
        %1261 = vmatmul.bf16.gmra.mxu0 %v1251
        %v1262 = vpop.f32.mrf.mxu0
        %v1263 = vadd.f32 0.0, %v1262
        %v1264 = vpop.f32.mrf.mxu0
        %1265 = vdwg.mxu0
        %v1266 = vadd.f32 %v1228, %v1263
        %s1267 = scalar_lea.vmem %s454, 112 [#allocation6]
        %v1268 = vld [vmem:[%s1267] sm:$0xf]
        %v1269 = vld [vmem:[%s1267 + $0x4] sm:$0xf]
        %v1270 = vld [vmem:[%s1267 + $0x8] sm:$0xf]
        %v1271 = vld [vmem:[%s1267 + $0xc] sm:$0xf]
        %v1272 = vrot.slane %v1005, 7
        %v1273 = vrot.slane %v1006, 6
        %v1274 = vsel %vm1008, %v1273, %v1272
        %v1275 = vpack.c.b16 %v1274, %v1274
        %v1280 = vunpack.c.l.b16 %v1268
        %v1281 = vunpack.c.l.b16 %v1269
        %v1282 = vunpack.c.l.b16 %v1270
        %v1283 = vunpack.c.l.b16 %v1271
        %v1284 = vpack.c.b16 %v1281, %v1280
        %v1285 = vpack.c.b16 %v1283, %v1282
        %v1289 = vsel %vm753, %v1275, 0
        %1291 = vmatpush.bf16.msra.mxu0 0
        %1292 = vmatpush.bf16.msra.mxu0 0
        %1293 = vmatpush.bf16.msra.mxu0 0
        %1294 = vmatpush.bf16.msra.mxu0 0
        %1295 = vmatpush.bf16.msra.mxu0 0
        %1296 = vmatpush.bf16.msra.mxu0 0
        %1297 = vmatpush.bf16.msra.mxu0 %v1285
        %1298 = vmatpush.bf16.msra.mxu0 %v1284
        %1299 = vmatmul.bf16.gmra.mxu0 %v1289
        %v1300 = vpop.f32.mrf.mxu0
        %v1301 = vadd.f32 0.0, %v1300
        %v1302 = vpop.f32.mrf.mxu0
        %1303 = vdwg.mxu0
        %v1304 = vadd.f32 %v1266, %v1301
        %s1305 = scalar_lea.vmem %s454, 128 [#allocation6]
        %v1306 = vld [vmem:[%s1305] sm:$0xf]
        %v1307 = vld [vmem:[%s1305 + $0x4] sm:$0xf]
        %v1308 = vld [vmem:[%s1305 + $0x8] sm:$0xf]
        %v1309 = vld [vmem:[%s1305 + $0xc] sm:$0xf]
        %v1312 = vunpack.c.l.b16 %v992
        %v1313 = vunpack.c.l.b16 %v994
        %v1314 = vpack.c.b16 %v1312, %v1312
        %v1315 = vpack.c.b16 %v1313, %v1313
        %v1316 = vunpack.c.l.b16 %v1314
        %v1317 = vunpack.c.l.b16 %v1315
        %v1318 = vrot.slane %v1317, 7
        %v1319 = vsel %vm1008, %v1318, %v1316
        %v1320 = vpack.c.b16 %v1319, %v1319
        %v1325 = vunpack.c.l.b16 %v1306
        %v1326 = vunpack.c.l.b16 %v1307
        %v1327 = vunpack.c.l.b16 %v1308
        %v1328 = vunpack.c.l.b16 %v1309
        %v1329 = vpack.c.b16 %v1326, %v1325
        %v1330 = vpack.c.b16 %v1328, %v1327
        %v1334 = vsel %vm753, %v1320, 0
        %1336 = vmatpush.bf16.msra.mxu0 0
        %1337 = vmatpush.bf16.msra.mxu0 0
        %1338 = vmatpush.bf16.msra.mxu0 0
        %1339 = vmatpush.bf16.msra.mxu0 0
        %1340 = vmatpush.bf16.msra.mxu0 0
        %1341 = vmatpush.bf16.msra.mxu0 0
        %1342 = vmatpush.bf16.msra.mxu0 %v1330
        %1343 = vmatpush.bf16.msra.mxu0 %v1329
        %1344 = vmatmul.bf16.gmra.mxu0 %v1334
        %v1345 = vpop.f32.mrf.mxu0
        %v1346 = vadd.f32 0.0, %v1345
        %v1347 = vpop.f32.mrf.mxu0
        %1348 = vdwg.mxu0
        %v1349 = vadd.f32 %v1304, %v1346
        %s1350 = scalar_lea.vmem %s454, 144 [#allocation6]
        %v1351 = vld [vmem:[%s1350] sm:$0xf]
        %v1352 = vld [vmem:[%s1350 + $0x4] sm:$0xf]
        %v1353 = vld [vmem:[%s1350 + $0x8] sm:$0xf]
        %v1354 = vld [vmem:[%s1350 + $0xc] sm:$0xf]
        %v1355 = vrot.slane %v1316, 1
        %v1356 = vsel %vm1008, %v1317, %v1355
        %v1357 = vpack.c.b16 %v1356, %v1356
        %v1362 = vunpack.c.l.b16 %v1351
        %v1363 = vunpack.c.l.b16 %v1352
        %v1364 = vunpack.c.l.b16 %v1353
        %v1365 = vunpack.c.l.b16 %v1354
        %v1366 = vpack.c.b16 %v1363, %v1362
        %v1367 = vpack.c.b16 %v1365, %v1364
        %v1371 = vsel %vm753, %v1357, 0
        %1373 = vmatpush.bf16.msra.mxu0 0
        %1374 = vmatpush.bf16.msra.mxu0 0
        %1375 = vmatpush.bf16.msra.mxu0 0
        %1376 = vmatpush.bf16.msra.mxu0 0
        %1377 = vmatpush.bf16.msra.mxu0 0
        %1378 = vmatpush.bf16.msra.mxu0 0
        %1379 = vmatpush.bf16.msra.mxu0 %v1367
        %1380 = vmatpush.bf16.msra.mxu0 %v1366
        %1381 = vmatmul.bf16.gmra.mxu0 %v1371
        %v1382 = vpop.f32.mrf.mxu0
        %v1383 = vadd.f32 0.0, %v1382
        %v1384 = vpop.f32.mrf.mxu0
        %1385 = vdwg.mxu0
        %v1386 = vadd.f32 %v1349, %v1383
        %s1387 = scalar_lea.vmem %s454, 160 [#allocation6]
        %v1388 = vld [vmem:[%s1387] sm:$0xf]
        %v1389 = vld [vmem:[%s1387 + $0x4] sm:$0xf]
        %v1390 = vld [vmem:[%s1387 + $0x8] sm:$0xf]
        %v1391 = vld [vmem:[%s1387 + $0xc] sm:$0xf]
        %v1392 = vrot.slane %v1316, 2
        %v1393 = vrot.slane %v1317, 1
        %v1394 = vsel %vm1008, %v1393, %v1392
        %v1395 = vpack.c.b16 %v1394, %v1394
        %v1400 = vunpack.c.l.b16 %v1388
        %v1401 = vunpack.c.l.b16 %v1389
        %v1402 = vunpack.c.l.b16 %v1390
        %v1403 = vunpack.c.l.b16 %v1391
        %v1404 = vpack.c.b16 %v1401, %v1400
        %v1405 = vpack.c.b16 %v1403, %v1402
        %v1409 = vsel %vm753, %v1395, 0
        %1411 = vmatpush.bf16.msra.mxu0 0
        %1412 = vmatpush.bf16.msra.mxu0 0
        %1413 = vmatpush.bf16.msra.mxu0 0
        %1414 = vmatpush.bf16.msra.mxu0 0
        %1415 = vmatpush.bf16.msra.mxu0 0
        %1416 = vmatpush.bf16.msra.mxu0 0
        %1417 = vmatpush.bf16.msra.mxu0 %v1405
        %1418 = vmatpush.bf16.msra.mxu0 %v1404
        %1419 = vmatmul.bf16.gmra.mxu0 %v1409
        %v1420 = vpop.f32.mrf.mxu0
        %v1421 = vadd.f32 0.0, %v1420
        %v1422 = vpop.f32.mrf.mxu0
        %1423 = vdwg.mxu0
        %v1424 = vadd.f32 %v1386, %v1421
        %s1425 = scalar_lea.vmem %s454, 176 [#allocation6]
        %v1426 = vld [vmem:[%s1425] sm:$0xf]
        %v1427 = vld [vmem:[%s1425 + $0x4] sm:$0xf]
        %v1428 = vld [vmem:[%s1425 + $0x8] sm:$0xf]
        %v1429 = vld [vmem:[%s1425 + $0xc] sm:$0xf]
        %v1430 = vrot.slane %v1316, 3
        %v1431 = vrot.slane %v1317, 2
        %v1432 = vsel %vm1008, %v1431, %v1430
        %v1433 = vpack.c.b16 %v1432, %v1432
        %v1438 = vunpack.c.l.b16 %v1426
        %v1439 = vunpack.c.l.b16 %v1427
        %v1440 = vunpack.c.l.b16 %v1428
        %v1441 = vunpack.c.l.b16 %v1429
        %v1442 = vpack.c.b16 %v1439, %v1438
        %v1443 = vpack.c.b16 %v1441, %v1440
        %v1447 = vsel %vm753, %v1433, 0
        %1449 = vmatpush.bf16.msra.mxu0 0
        %1450 = vmatpush.bf16.msra.mxu0 0
        %1451 = vmatpush.bf16.msra.mxu0 0
        %1452 = vmatpush.bf16.msra.mxu0 0
        %1453 = vmatpush.bf16.msra.mxu0 0
        %1454 = vmatpush.bf16.msra.mxu0 0
        %1455 = vmatpush.bf16.msra.mxu0 %v1443
        %1456 = vmatpush.bf16.msra.mxu0 %v1442
        %1457 = vmatmul.bf16.gmra.mxu0 %v1447
        %v1458 = vpop.f32.mrf.mxu0
        %v1459 = vadd.f32 0.0, %v1458
        %v1460 = vpop.f32.mrf.mxu0
        %1461 = vdwg.mxu0
        %v1462 = vadd.f32 %v1424, %v1459
        %s1463 = scalar_lea.vmem %s454, 192 [#allocation6]
        %v1464 = vld [vmem:[%s1463] sm:$0xf]
        %v1465 = vld [vmem:[%s1463 + $0x4] sm:$0xf]
        %v1466 = vld [vmem:[%s1463 + $0x8] sm:$0xf]
        %v1467 = vld [vmem:[%s1463 + $0xc] sm:$0xf]
        %v1468 = vrot.slane %v1316, 4
        %v1469 = vrot.slane %v1317, 3
        %v1470 = vsel %vm1008, %v1469, %v1468
        %v1471 = vpack.c.b16 %v1470, %v1470
        %v1476 = vunpack.c.l.b16 %v1464
        %v1477 = vunpack.c.l.b16 %v1465
        %v1478 = vunpack.c.l.b16 %v1466
        %v1479 = vunpack.c.l.b16 %v1467
        %v1480 = vpack.c.b16 %v1477, %v1476
        %v1481 = vpack.c.b16 %v1479, %v1478
        %v1485 = vsel %vm753, %v1471, 0
        %1487 = vmatpush.bf16.msra.mxu0 0
        %1488 = vmatpush.bf16.msra.mxu0 0
        %1489 = vmatpush.bf16.msra.mxu0 0
        %1490 = vmatpush.bf16.msra.mxu0 0
        %1491 = vmatpush.bf16.msra.mxu0 0
        %1492 = vmatpush.bf16.msra.mxu0 0
        %1493 = vmatpush.bf16.msra.mxu0 %v1481
        %1494 = vmatpush.bf16.msra.mxu0 %v1480
        %1495 = vmatmul.bf16.gmra.mxu0 %v1485
        %v1496 = vpop.f32.mrf.mxu0
        %v1497 = vadd.f32 0.0, %v1496
        %v1498 = vpop.f32.mrf.mxu0
        %1499 = vdwg.mxu0
        %v1500 = vadd.f32 %v1462, %v1497
        %s1501 = scalar_lea.vmem %s454, 208 [#allocation6]
        %v1502 = vld [vmem:[%s1501] sm:$0xf]
        %v1503 = vld [vmem:[%s1501 + $0x4] sm:$0xf]
        %v1504 = vld [vmem:[%s1501 + $0x8] sm:$0xf]
        %v1505 = vld [vmem:[%s1501 + $0xc] sm:$0xf]
        %v1506 = vrot.slane %v1316, 5
        %v1507 = vrot.slane %v1317, 4
        %v1508 = vsel %vm1008, %v1507, %v1506
        %v1509 = vpack.c.b16 %v1508, %v1508
        %v1514 = vunpack.c.l.b16 %v1502
        %v1515 = vunpack.c.l.b16 %v1503
        %v1516 = vunpack.c.l.b16 %v1504
        %v1517 = vunpack.c.l.b16 %v1505
        %v1518 = vpack.c.b16 %v1515, %v1514
        %v1519 = vpack.c.b16 %v1517, %v1516
        %v1523 = vsel %vm753, %v1509, 0
        %1525 = vmatpush.bf16.msra.mxu0 0
        %1526 = vmatpush.bf16.msra.mxu0 0
        %1527 = vmatpush.bf16.msra.mxu0 0
        %1528 = vmatpush.bf16.msra.mxu0 0
        %1529 = vmatpush.bf16.msra.mxu0 0
        %1530 = vmatpush.bf16.msra.mxu0 0
        %1531 = vmatpush.bf16.msra.mxu0 %v1519
        %1532 = vmatpush.bf16.msra.mxu0 %v1518
        %1533 = vmatmul.bf16.gmra.mxu0 %v1523
        %v1534 = vpop.f32.mrf.mxu0
        %v1535 = vadd.f32 0.0, %v1534
        %v1536 = vpop.f32.mrf.mxu0
        %1537 = vdwg.mxu0
        %v1538 = vadd.f32 %v1500, %v1535
        %v1539 = vld [vmem:[#allocation4] sm:$0x3]
        %v1540 = vpack.c.bf16 %v1538, %v1538
        %v1541 = vld [vmem:[%s530] sm:$0xf]
        %v1542 = vld [vmem:[%s530 + $0x4] sm:$0xf]
        %v1543 = vld [vmem:[%s530 + $0x8] sm:$0xf]
        %v1544 = vld [vmem:[%s530 + $0xc] sm:$0xf]
        %v1549 = vunpack.c.l.b16 %v1541
        %v1550 = vunpack.c.l.b16 %v1542
        %v1551 = vunpack.c.l.b16 %v1543
        %v1552 = vunpack.c.l.b16 %v1544
        %v1553 = vpack.c.b16 %v1550, %v1549
        %v1554 = vpack.c.b16 %v1552, %v1551
        %v1558 = vsel %vm753, %v1540, 0
        %1560 = vmatpush.bf16.msra.mxu0 0
        %1561 = vmatpush.bf16.msra.mxu0 0
        %1562 = vmatpush.bf16.msra.mxu0 0
        %1563 = vmatpush.bf16.msra.mxu0 0
        %1564 = vmatpush.bf16.msra.mxu0 0
        %1565 = vmatpush.bf16.msra.mxu0 0
        %1566 = vmatpush.bf16.msra.mxu0 %v1554
        %1567 = vmatpush.bf16.msra.mxu0 %v1553
        %1568 = vmatmul.bf16.gmra.mxu0 %v1558
        %v1569 = vpop.f32.mrf.mxu0
        %v1570 = vadd.f32 0.0, %v1569
        %v1571 = vpop.f32.mrf.mxu0
        %1572 = vdwg.mxu0
        %v1573 = vadd.f32 %v1539, %v1570
        %1574 = vst [vmem:[#allocation4] sm:$0x3] %v1573
        %p1575 = scmp.eq.s32.totalorder %s26, 1
        // Predicated region
        $region111: #{_lambda_.1} parent=97 // pred_check
          %p1576 = pneg %p1575
        $region112: #{_lambda_.1} parent=97 // pred_check_branch
          %1578 = sbr.rel (%p1576) target = $region114
        $region113: #{_lambda_.1} parent=97 // pred_region
          %v1579 = vld [vmem:[#allocation4] sm:$0x3]
          %v1580 = vld [vmem:[%s6] sm:$0x1]
          %v1582 = vperm.slane %v1580, 0
          %v1584 = vadd.f32 %v1579, %v1582
          %v1585 = vmax.f32 %v1584, 0.0
          %v1586 = vpack.c.bf16 %v1585, %v1585
          %v1587 = vld [vmem:[%s7] sm:$0xf]
          %v1588 = vld [vmem:[%s7 + $0x4] sm:$0xf]
          %v1589 = vld [vmem:[%s7 + $0x8] sm:$0xf]
          %v1590 = vld [vmem:[%s7 + $0xc] sm:$0xf]
          %v1591 = vld [vmem:[%s7 + $0x10] sm:$0xf]
          %v1592 = vld [vmem:[%s7 + $0x14] sm:$0xf]
          %v1593 = vld [vmem:[%s7 + $0x18] sm:$0xf]
          %v1594 = vld [vmem:[%s7 + $0x1c] sm:$0xf]
          %v1595 = vld [vmem:[%s7 + $0x20] sm:$0xf]
          %v1596 = vld [vmem:[%s7 + $0x24] sm:$0xf]
          %v1597 = vld [vmem:[%s7 + $0x28] sm:$0xf]
          %v1598 = vld [vmem:[%s7 + $0x2c] sm:$0xf]
          %v1599 = vld [vmem:[%s7 + $0x30] sm:$0xf]
          %v1600 = vld [vmem:[%s7 + $0x34] sm:$0xf]
          %v1601 = vld [vmem:[%s7 + $0x38] sm:$0xf]
          %v1602 = vld [vmem:[%s7 + $0x3c] sm:$0xf]
          %v1603 = vld [vmem:[%s8] sm:$0x1]
          %v1605 = vperm.slane %v1603, 0
          %v1623 = vunpack.c.l.b16 %v1587
          %v1624 = vunpack.c.l.b16 %v1588
          %v1625 = vunpack.c.l.b16 %v1589
          %v1626 = vunpack.c.l.b16 %v1590
          %v1627 = vunpack.c.l.b16 %v1591
          %v1628 = vunpack.c.l.b16 %v1592
          %v1629 = vunpack.c.l.b16 %v1593
          %v1630 = vunpack.c.l.b16 %v1594
          %v1631 = vunpack.c.l.b16 %v1595
          %v1632 = vunpack.c.l.b16 %v1596
          %v1633 = vunpack.c.l.b16 %v1597
          %v1634 = vunpack.c.l.b16 %v1598
          %v1635 = vunpack.c.l.b16 %v1599
          %v1636 = vunpack.c.l.b16 %v1600
          %v1637 = vunpack.c.l.b16 %v1601
          %v1638 = vunpack.c.l.b16 %v1602
          %v1639 = vpack.c.b16 %v1624, %v1623
          %v1640 = vpack.c.b16 %v1626, %v1625
          %v1641 = vpack.c.b16 %v1628, %v1627
          %v1642 = vpack.c.b16 %v1630, %v1629
          %v1643 = vpack.c.b16 %v1632, %v1631
          %v1644 = vpack.c.b16 %v1634, %v1633
          %v1645 = vpack.c.b16 %v1636, %v1635
          %v1646 = vpack.c.b16 %v1638, %v1637
          %1655 = vmatpush.bf16.msra.mxu0 %v1646
          %1656 = vmatpush.bf16.msra.mxu0 %v1645
          %1657 = vmatpush.bf16.msra.mxu0 %v1644
          %1658 = vmatpush.bf16.msra.mxu0 %v1643
          %1659 = vmatpush.bf16.msra.mxu0 %v1642
          %1660 = vmatpush.bf16.msra.mxu0 %v1641
          %1661 = vmatpush.bf16.msra.mxu0 %v1640
          %1662 = vmatpush.bf16.msra.mxu0 %v1639
          %1663 = vmatmul.bf16.gmra.mxu0 %v1586
          %v1664 = vpop.f32.mrf.mxu0
          %v1665 = vadd.f32 %v1605, %v1664
          %v1666 = vpop.f32.mrf.mxu0
          %1667 = vdwg.mxu0
          %v1668 = vmax.f32 %v1665, 0.0
          %v1669 = vpack.c.bf16 %v1668, %v1668
          %v1670 = vld [vmem:[%s9] sm:$0xf]
          %v1671 = vld [vmem:[%s9 + $0x4] sm:$0xf]
          %v1672 = vld [vmem:[%s9 + $0x8] sm:$0xf]
          %v1673 = vld [vmem:[%s9 + $0xc] sm:$0xf]
          %v1674 = vld [vmem:[%s9 + $0x10] sm:$0xf]
          %v1675 = vld [vmem:[%s9 + $0x14] sm:$0xf]
          %v1676 = vld [vmem:[%s9 + $0x18] sm:$0xf]
          %v1677 = vld [vmem:[%s9 + $0x1c] sm:$0xf]
          %v1678 = vld [vmem:[%s9 + $0x20] sm:$0xf]
          %v1679 = vld [vmem:[%s9 + $0x24] sm:$0xf]
          %v1680 = vld [vmem:[%s9 + $0x28] sm:$0xf]
          %v1681 = vld [vmem:[%s9 + $0x2c] sm:$0xf]
          %v1682 = vld [vmem:[%s9 + $0x30] sm:$0xf]
          %v1683 = vld [vmem:[%s9 + $0x34] sm:$0xf]
          %v1684 = vld [vmem:[%s9 + $0x38] sm:$0xf]
          %v1685 = vld [vmem:[%s9 + $0x3c] sm:$0xf]
          %v1686 = vld [vmem:[%s10] sm:$0x1]
          %v1688 = vperm.slane %v1686, 0
          %v1706 = vunpack.c.l.b16 %v1670
          %v1707 = vunpack.c.l.b16 %v1671
          %v1708 = vunpack.c.l.b16 %v1672
          %v1709 = vunpack.c.l.b16 %v1673
          %v1710 = vunpack.c.l.b16 %v1674
          %v1711 = vunpack.c.l.b16 %v1675
          %v1712 = vunpack.c.l.b16 %v1676
          %v1713 = vunpack.c.l.b16 %v1677
          %v1714 = vunpack.c.l.b16 %v1678
          %v1715 = vunpack.c.l.b16 %v1679
          %v1716 = vunpack.c.l.b16 %v1680
          %v1717 = vunpack.c.l.b16 %v1681
          %v1718 = vunpack.c.l.b16 %v1682
          %v1719 = vunpack.c.l.b16 %v1683
          %v1720 = vunpack.c.l.b16 %v1684
          %v1721 = vunpack.c.l.b16 %v1685
          %v1722 = vpack.c.b16 %v1707, %v1706
          %v1723 = vpack.c.b16 %v1709, %v1708
          %v1724 = vpack.c.b16 %v1711, %v1710
          %v1725 = vpack.c.b16 %v1713, %v1712
          %v1726 = vpack.c.b16 %v1715, %v1714
          %v1727 = vpack.c.b16 %v1717, %v1716
          %v1728 = vpack.c.b16 %v1719, %v1718
          %v1729 = vpack.c.b16 %v1721, %v1720
          %1738 = vmatpush.bf16.msra.mxu0 %v1729
          %1739 = vmatpush.bf16.msra.mxu0 %v1728
          %1740 = vmatpush.bf16.msra.mxu0 %v1727
          %1741 = vmatpush.bf16.msra.mxu0 %v1726
          %1742 = vmatpush.bf16.msra.mxu0 %v1725
          %1743 = vmatpush.bf16.msra.mxu0 %v1724
          %1744 = vmatpush.bf16.msra.mxu0 %v1723
          %1745 = vmatpush.bf16.msra.mxu0 %v1722
          %1746 = vmatmul.bf16.gmra.mxu0 %v1669
          %v1747 = vpop.f32.mrf.mxu0
          %v1748 = vadd.f32 %v1688, %v1747
          %v1749 = vpop.f32.mrf.mxu0
          %1750 = vdwg.mxu0
          %vm1751 = vcmask 123904
          %1752 = vst.msk [vmem:[#allocation9] sm:$0x3] %vm1751, %v1748
        $region114: #{_lambda_.1} parent=97 // pred_fallthru
          _
        // Predicated region
        $region115: #{_lambda_.1} parent=97 // pred_check
          %p1753 = pneg %p300
        $region116: #{_lambda_.1} parent=97 // pred_check_branch
          %1755 = sbr.rel (%p1753) target = $region118
        $region117: #{_lambda_.1} parent=97 // pred_region
          %1757 = vsyncadd [#allocation8], 0
          %s1759 = sshll.u32 [#allocation9], 4
          %s1760 = int_to_ptr.vmem [resolvable:$true] %s1759
          %s1761 = sshll.u32 %s11, 4
          %s1762 = int_to_ptr.hbm [resolvable:$true] %s1761
          %1764 = dma.vmem_to_hbm [thread:$0]  %s1760, 32, %s1762, [#allocation8]
        $region118: #{_lambda_.1} parent=97 // pred_fallthru
          _
        // Predicated region
        $region119: #{_lambda_.1} parent=97 // pred_check
          %p1765 = pneg %p300
        $region120: #{_lambda_.1} parent=97 // pred_check_branch
          %1767 = sbr.rel (%p1765) target = $region122
        $region121: #{_lambda_.1} parent=97 // pred_region
          %1769 = dma.done [#allocation8], 32
        $region122: #{_lambda_.1} parent=97 // pred_fallthru
          _
      $region98: #{_lambda_.1} parent=5 // pred_fallthru
        _
      %p1770 = scmp.le.s32.totalorder 2, %s21
      // Predicated region
      $region123: #{_lambda_.1} parent=5 // pred_check
        %p1771 = pneg %p1770
      $region124: #{_lambda_.1} parent=5 // pred_check_branch
        %1773 = sbr.rel (%p1771) target = $region126
      $region125: #{_lambda_.1} parent=5 // pred_region
        %s1774 = ssub.s32 %s21, 2
      $region126: #{_lambda_.1} parent=5 // pred_fallthru
        _
    $region6: #{_lambda_.1} parent=1 // loop_footer
      %s25 = sadd.s32 1, %s21
    $region7: #{_lambda_.1} parent=1 // loop_footer_branch
      %20 = sbr.rel target = $region3
    $region8: #{_lambda_.1} parent=1 // loop_exit
      _
    %1775 = vsyncpa [#allocation7], 1
    %s1776 = scalar_lea.sflag [#allocation7], 1
    %1777 = vsyncpa %s1776, 1
    %1778 = vsyncpa [#allocation8], 1
    %s1779 = scalar_lea.sflag [#allocation8], 1
    %1780 = vsyncpa %s1779, 1

</llo_original>
